<compile_context>
chip_gen: v7x
topology: tpu7x:2x2x1
jax: 0.10.0
libtpu: 0.0.40
codegen_flags: <defaults>
</compile_context>

<pallas_src>
import numpy as np
import jax
import jax.numpy as jnp
from jax.experimental import pallas as pl
from jax.experimental.pallas import tpu as pltpu

_WIDTH = 128
_ALIGN = 8


def _make_kernel(B, K, channels, n_layers, w_meta, b_meta):
    pad = K // 2

    def kernel(x_ref, w_ref, b_ref, o_ref):
        def W(name):
            off, r, c = w_meta[name]
            return w_ref[off:off + r, :c]

        def bias(name):
            row, c = b_meta[name]
            return b_ref[row:row + 1, :c]

        def dot(a, b):
            # default MXU precision, f32 accumulation
            return jnp.dot(a, b, preferred_element_type=jnp.float32)

        def conv_im2col(h, L, C):
            """(B*L, C) -> (B*L, K*C); col j*C+ci = x[b, ci, l + j - pad] (0 outside)."""
            M = B * L
            row_mod = jax.lax.broadcasted_iota(jnp.int32, (M, C), 0) % L
            zpad = jnp.zeros((pad, C), jnp.float32)
            hp = jnp.concatenate([zpad, h, zpad], axis=0)        # (M + 2*pad, C)
            taps = []
            for j in range(K):
                s = j - pad
                t = hp[j:j + M, :]
                if s < 0:                                        # zero first -s rows / batch
                    t = jnp.where(row_mod < -s, 0.0, t)
                elif s > 0:                                      # zero last s rows / batch
                    t = jnp.where(row_mod >= L - s, 0.0, t)
                taps.append(t)
            return jnp.concatenate(taps, axis=1)                 # (M, K*C)

        # ---- Linear -> ReLU (Dropout = identity in eval mode) ----
        h = jnp.maximum(dot(x_ref[...], W("lin")) + bias("lin"), 0.0)   # (B, C0)

        L = 1
        for i in range(n_layers):
            cout = channels[i + 1]
            M_old = B * L

            # ---- ConvTranspose1d(cin, cout, K, stride=K): L -> L*K ----
            u = dot(h, W(f"ct{i}"))                              # (M_old, K*cout)
            y = jnp.concatenate(
                [u[:, j * cout:(j + 1) * cout] for j in range(K)], axis=0)  # tap-major
            h = dot(W(f"perm{i}"), y) + bias(f"ct{i}")           # natural row order
            L = L * K

            # ---- ConvLayers: 2 x (Conv1d same -> BN(eval, folded) -> ReLU) ----
            for m in range(2):
                hcat = conv_im2col(h, L, cout)                   # (B*L, K*cout)
                h = jnp.maximum(dot(hcat, W(f"c{i}_{m}")) + bias(f"c{i}_{m}"), 0.0)

        # ---- output Conv1d(c_last, 1, K, padding=K//2) ----
        c_last = channels[n_layers]
        hcat = conv_im2col(h, L, c_last)                         # (B*L, K*c_last)
        o_ref[...] = dot(hcat, W("out")) + bias("out")           # (B*L, 1)

    return kernel


def pack_params(pt, *, B, K, channels, n_layers, eps=1e-5):
    """Fold BN into conv weights, reshape to matmul layout, and pack everything
    into one (R, 128) weight buffer + one (8, 128) bias buffer."""
    mats, biases = [], []

    mats.append(("lin", pt["lin_W"].T))                          # (F, C0)
    biases.append(("lin", pt["lin_b"]))

    L = 1
    for i in range(n_layers):
        cin, cout = channels[i], channels[i + 1]

        # ConvTranspose1d weight (cin, cout, K) -> (cin, K*cout), col = j*cout + co
        mats.append((f"ct{i}",
                     pt[f"ct{i}_W"].transpose(0, 2, 1).reshape(cin, K * cout)))
        biases.append((f"ct{i}", pt[f"ct{i}_b"]))

        # static permutation: tap-major row (j*M_old + b*L + l) -> natural (b*L_new + l*K + j)
        M_old, L_new = B * L, L * K
        M_new = B * L_new
        P = np.zeros((M_new, M_new), np.float32)
        for b in range(B):
            for l in range(L):
                for j in range(K):
                    P[b * L_new + l * K + j, j * M_old + b * L + l] = 1.0
        mats.append((f"perm{i}", P))
        L = L_new

        for m in range(2):
            scale = pt[f"bn{i}_{m}_gamma"] / np.sqrt(pt[f"bn{i}_{m}_var"] + eps)
            Wf = pt[f"c{i}_{m}_W"].transpose(2, 1, 0).reshape(K * cout, cout) * scale[None, :]
            shift = (pt[f"c{i}_{m}_b"] - pt[f"bn{i}_{m}_mean"]) * scale + pt[f"bn{i}_{m}_beta"]
            mats.append((f"c{i}_{m}", Wf))
            biases.append((f"c{i}_{m}", shift))

    c_last = channels[n_layers]
    mats.append(("out", pt["out_W"].transpose(2, 1, 0).reshape(K * c_last, 1)))
    biases.append(("out", pt["out_b"]))

    # pack weights: each matrix starts at an 8-aligned row, cols zero-padded to 128
    w_meta, off = {}, 0
    for name, m in mats:
        r, c = m.shape
        assert c <= _WIDTH
        w_meta[name] = (off, r, c)
        off += -(-r // _ALIGN) * _ALIGN
    wbuf = np.zeros((off, _WIDTH), np.float32)
    for name, m in mats:
        o, r, c = w_meta[name]
        wbuf[o:o + r, :c] = m

    b_meta = {}
    bbuf = np.zeros((max(len(biases), _ALIGN), _WIDTH), np.float32)
    for idx, (name, v) in enumerate(biases):
        b_meta[name] = (idx, v.shape[0])
        bbuf[idx, :v.shape[0]] = v

    return jnp.asarray(wbuf), jnp.asarray(bbuf), w_meta, b_meta


def energy_prediction_forward(x, wbuf, bbuf, *, K, channels, n_layers, out_len,
                              w_meta, b_meta):
    B = x.shape[0]
    L_final = K ** n_layers
    kernel = _make_kernel(B, K, channels, n_layers, w_meta, b_meta)
    vmem = pl.BlockSpec(memory_space=pltpu.MemorySpace.VMEM)
    out = pl.pallas_call(
        kernel,
        out_shape=jax.ShapeDtypeStruct((B * L_final, 1), jnp.float32),
        in_specs=[vmem, vmem, vmem],
        out_specs=vmem,
    )(x, wbuf, bbuf)
    # glue: rows are (b*L + l); crop to output_shape and squeeze the channel dim.
    return out.reshape(B, L_final)[:, :out_len]


def reference_forward(x, pt, K, channels, n_layers, out_len, eps=1e-5):
    """Pure numpy, PyTorch (NCL) semantics, eval mode."""
    x = np.asarray(x, np.float64)
    h = np.maximum(x @ pt['lin_W'].T + pt['lin_b'], 0.0)   # (B, C0)
    h = h[:, :, None]                                       # (B, C0, 1)
    for i in range(n_layers):
        W, bb = pt[f'ct{i}_W'], pt[f'ct{i}_b']              # (cin, cout, K)
        B_, _, L = h.shape
        cout = W.shape[1]
        y = np.zeros((B_, cout, L * K))
        for l in range(L):
            for j in range(K):
                y[:, :, l * K + j] = h[:, :, l] @ W[:, :, j]
        h = y + bb[None, :, None]
        for m in range(2):
            W, bb = pt[f'c{i}_{m}_W'], pt[f'c{i}_{m}_b']    # (cout, cin, K)
            g, be = pt[f'bn{i}_{m}_gamma'], pt[f'bn{i}_{m}_beta']
            mu, var = pt[f'bn{i}_{m}_mean'], pt[f'bn{i}_{m}_var']
            B_, _, L = h.shape
            pad = K // 2
            hp = np.pad(h, ((0, 0), (0, 0), (pad, pad)))
            y = np.zeros((B_, W.shape[0], L))
            for l in range(L):
                for j in range(K):
                    y[:, :, l] += hp[:, :, l + j] @ W[:, :, j].T
            y = y + bb[None, :, None]
            y = (y - mu[None, :, None]) / np.sqrt(var[None, :, None] + eps)
            y = y * g[None, :, None] + be[None, :, None]
            h = np.maximum(y, 0.0)
    W, bb = pt['out_W'], pt['out_b']
    B_, _, L = h.shape
    pad = K // 2
    hp = np.pad(h, ((0, 0), (0, 0), (pad, pad)))
    y = np.zeros((B_, 1, L))
    for l in range(L):
        for j in range(K):
            y[:, :, l] += hp[:, :, l + j] @ W[:, :, j].T
    y = y + bb[None, :, None]
    return np.squeeze(y[:, :, :out_len])


if __name__ == "__main__":
    INPUT_SHAPE = (16,)
    OUTPUT_SHAPE = (8,)
    K = 3
    B = 2
    EPS = 1e-5

    n_layers = int(np.ceil(np.log(OUTPUT_SHAPE[0]) / np.log(K)))          # = 2
    channels = (np.linspace(INPUT_SHAPE[0], 1, num=n_layers + 2)
                .astype(int) * 2).tolist()                                 # [32, 22, 12, 2]

    key_holder = [jax.random.PRNGKey(0)]

    def rnd(shape, scale=0.2):
        key_holder[0], sub = jax.random.split(key_holder[0])
        return np.asarray(scale * jax.random.normal(sub, shape, dtype=jnp.float32))

    # ---- deterministic synthetic parameters in PyTorch layout ----
    pt = {}
    pt['lin_W'] = rnd((channels[0], INPUT_SHAPE[0]))
    pt['lin_b'] = rnd((channels[0],))
    for i in range(n_layers):
        cin, cout = channels[i], channels[i + 1]
        pt[f'ct{i}_W'] = rnd((cin, cout, K))
        pt[f'ct{i}_b'] = rnd((cout,))
        for m in range(2):
            pt[f'c{i}_{m}_W'] = rnd((cout, cout, K))
            pt[f'c{i}_{m}_b'] = rnd((cout,))
            pt[f'bn{i}_{m}_gamma'] = 1.0 + rnd((cout,), 0.1)
            pt[f'bn{i}_{m}_beta'] = rnd((cout,), 0.1)
            pt[f'bn{i}_{m}_mean'] = rnd((cout,), 0.1)
            pt[f'bn{i}_{m}_var'] = 1.0 + np.abs(rnd((cout,), 0.1))
    c_last = channels[n_layers]
    pt['out_W'] = rnd((1, c_last, K))
    pt['out_b'] = rnd((1,))

    # ---- pack into 2 buffers (BN folded, conv taps fused, perm matrices baked) ----
    wbuf, bbuf, w_meta, b_meta = pack_params(pt, B=B, K=K, channels=channels,
                                             n_layers=n_layers, eps=EPS)

    key_holder[0], sub = jax.random.split(key_holder[0])
    x = jax.random.normal(sub, (B, INPUT_SHAPE[0]), dtype=jnp.float32)

    out = energy_prediction_forward(x, wbuf, bbuf, K=K, channels=channels,
                                    n_layers=n_layers, out_len=OUTPUT_SHAPE[0],
                                    w_meta=w_meta, b_meta=b_meta)
    out = jax.block_until_ready(out)

    ref = reference_forward(np.asarray(x), pt, K, channels, n_layers,
                            OUTPUT_SHAPE[0], EPS)
    np.testing.assert_allclose(np.asarray(out), ref, rtol=2e-2, atol=2e-2)
    print("KERNEL_OK")
</pallas_src>

<mosaic_0001>
module attributes {stable_mosaic.version = 11 : i64} {
  func.func @kernel(%arg0: memref<2x16xf32, #tpu.memory_space<vmem>>, %arg1: memref<368x128xf32, #tpu.memory_space<vmem>>, %arg2: memref<8x128xf32, #tpu.memory_space<vmem>>, %arg3: memref<18x1xf32, #tpu.memory_space<vmem>>) attributes {dimension_semantics = [], scalar_prefetch = 0 : i64, scratch_operands = 0 : i64, tpu.core_type = #tpu.core_type<tc>} {
    %c0 = arith.constant 0 : index
    %c0_0 = arith.constant 0 : index
    %0 = vector.load %arg0[%c0, %c0_0] : memref<2x16xf32, #tpu.memory_space<vmem>>, vector<2x16xf32>
    %c0_1 = arith.constant 0 : index
    %c0_2 = arith.constant 0 : index
    %1 = vector.load %arg1[%c0_1, %c0_2] : memref<368x128xf32, #tpu.memory_space<vmem>>, vector<16x32xf32>
    %cst = arith.constant dense<0.000000e+00> : vector<2x32xf32>
    %2 = tpu.matmul %0, %1, %cst {dimension_numbers = #tpu.dot_dimension_numbers<[1], [0], [0], [1], [0, 0, 1, 1], [], []>} : vector<2x16xf32>, vector<16x32xf32>, vector<2x32xf32> -> vector<2x32xf32>
    %c0_3 = arith.constant 0 : index
    %c0_4 = arith.constant 0 : index
    %3 = vector.load %arg2[%c0_3, %c0_4] : memref<8x128xf32, #tpu.memory_space<vmem>>, vector<1x32xf32>
    %4 = vector.broadcast %3 : vector<1x32xf32> to vector<2x32xf32>
    %5 = arith.addf %2, %4 : vector<2x32xf32>
    %cst_5 = arith.constant 0.000000e+00 : f32
    %6 = vector.broadcast %cst_5 : f32 to vector<2x32xf32>
    %7 = arith.maximumf %5, %6 : vector<2x32xf32>
    %c16 = arith.constant 16 : index
    %c0_6 = arith.constant 0 : index
    %8 = vector.load %arg1[%c16, %c0_6] : memref<368x128xf32, #tpu.memory_space<vmem>>, vector<32x66xf32>
    %cst_7 = arith.constant dense<0.000000e+00> : vector<2x66xf32>
    %9 = tpu.matmul %7, %8, %cst_7 {dimension_numbers = #tpu.dot_dimension_numbers<[1], [0], [0], [1], [0, 0, 1, 1], [], []>} : vector<2x32xf32>, vector<32x66xf32>, vector<2x66xf32> -> vector<2x66xf32>
    %10 = vector.extract_strided_slice %9 {offsets = [0, 0], sizes = [2, 22], strides = [1, 1]} : vector<2x66xf32> to vector<2x22xf32>
    %11 = vector.extract_strided_slice %9 {offsets = [0, 22], sizes = [2, 22], strides = [1, 1]} : vector<2x66xf32> to vector<2x22xf32>
    %12 = vector.extract_strided_slice %9 {offsets = [0, 44], sizes = [2, 22], strides = [1, 1]} : vector<2x66xf32> to vector<2x22xf32>
    %13 = tpu.concatenate %10, %11, %12 in 0 : vector<2x22xf32>, vector<2x22xf32>, vector<2x22xf32> -> vector<6x22xf32>
    %c48 = arith.constant 48 : index
    %c0_8 = arith.constant 0 : index
    %14 = vector.load %arg1[%c48, %c0_8] : memref<368x128xf32, #tpu.memory_space<vmem>>, vector<6x6xf32>
    %cst_9 = arith.constant dense<0.000000e+00> : vector<6x22xf32>
    %15 = tpu.matmul %14, %13, %cst_9 {dimension_numbers = #tpu.dot_dimension_numbers<[1], [0], [0], [1], [0, 0, 1, 1], [], []>} : vector<6x6xf32>, vector<6x22xf32>, vector<6x22xf32> -> vector<6x22xf32>
    %c1 = arith.constant 1 : index
    %c0_10 = arith.constant 0 : index
    %16 = vector.load %arg2[%c1, %c0_10] : memref<8x128xf32, #tpu.memory_space<vmem>>, vector<1x22xf32>
    %17 = vector.broadcast %16 : vector<1x22xf32> to vector<6x22xf32>
    %18 = arith.addf %15, %17 : vector<6x22xf32>
    %19 = tpu.iota {dimensions = array<i32: 0>} : vector<6x22xi32>
    %c3_i32 = arith.constant 3 : i32
    %c0_i32 = arith.constant 0 : i32
    %20 = arith.cmpi eq, %c3_i32, %c0_i32 : i32
    %c1_i32 = arith.constant 1 : i32
    %21 = arith.select %20, %c1_i32, %c3_i32 : i32
    %22 = vector.broadcast %21 : i32 to vector<6x22xi32>
    %23 = arith.remsi %19, %22 : vector<6x22xi32>
    %c0_i32_11 = arith.constant 0 : i32
    %24 = vector.broadcast %c0_i32_11 : i32 to vector<6x22xi32>
    %25 = arith.cmpi ne, %23, %24 : vector<6x22xi32>
    %c0_i32_12 = arith.constant 0 : i32
    %26 = vector.broadcast %c0_i32_12 : i32 to vector<6x22xi32>
    %27 = arith.cmpi slt, %23, %26 : vector<6x22xi32>
    %c0_i32_13 = arith.constant 0 : i32
    %28 = arith.cmpi slt, %21, %c0_i32_13 : i32
    %29 = vector.broadcast %28 : i1 to vector<6x22xi1>
    %30 = vector.broadcast %29 : vector<6x22xi1> to vector<6x22xi1>
    %31 = arith.xori %27, %30 : vector<6x22xi1>
    %32 = arith.andi %31, %25 : vector<6x22xi1>
    %33 = vector.broadcast %21 : i32 to vector<6x22xi32>
    %34 = arith.addi %23, %33 : vector<6x22xi32>
    %35 = arith.select %32, %34, %23 : vector<6x22xi1>, vector<6x22xi32>
    %cst_14 = arith.constant 0.000000e+00 : f32
    %36 = vector.broadcast %cst_14 : f32 to vector<1x22xf32>
    %37 = tpu.concatenate %36, %18, %36 in 0 : vector<1x22xf32>, vector<6x22xf32>, vector<1x22xf32> -> vector<8x22xf32>
    %38 = vector.extract_strided_slice %37 {offsets = [0, 0], sizes = [6, 22], strides = [1, 1]} : vector<8x22xf32> to vector<6x22xf32>
    %c1_i32_15 = arith.constant 1 : i32
    %39 = vector.broadcast %c1_i32_15 : i32 to vector<6x22xi32>
    %40 = arith.cmpi slt, %35, %39 : vector<6x22xi32>
    %cst_16 = arith.constant 0.000000e+00 : f32
    %41 = vector.broadcast %cst_16 : f32 to vector<6x22xf32>
    %42 = arith.select %40, %41, %38 : vector<6x22xi1>, vector<6x22xf32>
    %43 = vector.extract_strided_slice %37 {offsets = [1, 0], sizes = [6, 22], strides = [1, 1]} : vector<8x22xf32> to vector<6x22xf32>
    %44 = vector.extract_strided_slice %37 {offsets = [2, 0], sizes = [6, 22], strides = [1, 1]} : vector<8x22xf32> to vector<6x22xf32>
    %c2_i32 = arith.constant 2 : i32
    %45 = vector.broadcast %c2_i32 : i32 to vector<6x22xi32>
    %46 = arith.cmpi sge, %35, %45 : vector<6x22xi32>
    %cst_17 = arith.constant 0.000000e+00 : f32
    %47 = vector.broadcast %cst_17 : f32 to vector<6x22xf32>
    %48 = arith.select %46, %47, %44 : vector<6x22xi1>, vector<6x22xf32>
    %49 = tpu.concatenate %42, %43, %48 in 1 : vector<6x22xf32>, vector<6x22xf32>, vector<6x22xf32> -> vector<6x66xf32>
    %c56 = arith.constant 56 : index
    %c0_18 = arith.constant 0 : index
    %50 = vector.load %arg1[%c56, %c0_18] : memref<368x128xf32, #tpu.memory_space<vmem>>, vector<66x22xf32>
    %cst_19 = arith.constant dense<0.000000e+00> : vector<6x22xf32>
    %51 = tpu.matmul %49, %50, %cst_19 {dimension_numbers = #tpu.dot_dimension_numbers<[1], [0], [0], [1], [0, 0, 1, 1], [], []>} : vector<6x66xf32>, vector<66x22xf32>, vector<6x22xf32> -> vector<6x22xf32>
    %c2 = arith.constant 2 : index
    %c0_20 = arith.constant 0 : index
    %52 = vector.load %arg2[%c2, %c0_20] : memref<8x128xf32, #tpu.memory_space<vmem>>, vector<1x22xf32>
    %53 = vector.broadcast %52 : vector<1x22xf32> to vector<6x22xf32>
    %54 = arith.addf %51, %53 : vector<6x22xf32>
    %cst_21 = arith.constant 0.000000e+00 : f32
    %55 = vector.broadcast %cst_21 : f32 to vector<6x22xf32>
    %56 = arith.maximumf %54, %55 : vector<6x22xf32>
    %57 = tpu.iota {dimensions = array<i32: 0>} : vector<6x22xi32>
    %c3_i32_22 = arith.constant 3 : i32
    %c0_i32_23 = arith.constant 0 : i32
    %58 = arith.cmpi eq, %c3_i32_22, %c0_i32_23 : i32
    %c1_i32_24 = arith.constant 1 : i32
    %59 = arith.select %58, %c1_i32_24, %c3_i32_22 : i32
    %60 = vector.broadcast %59 : i32 to vector<6x22xi32>
    %61 = arith.remsi %57, %60 : vector<6x22xi32>
    %c0_i32_25 = arith.constant 0 : i32
    %62 = vector.broadcast %c0_i32_25 : i32 to vector<6x22xi32>
    %63 = arith.cmpi ne, %61, %62 : vector<6x22xi32>
    %c0_i32_26 = arith.constant 0 : i32
    %64 = vector.broadcast %c0_i32_26 : i32 to vector<6x22xi32>
    %65 = arith.cmpi slt, %61, %64 : vector<6x22xi32>
    %c0_i32_27 = arith.constant 0 : i32
    %66 = arith.cmpi slt, %59, %c0_i32_27 : i32
    %67 = vector.broadcast %66 : i1 to vector<6x22xi1>
    %68 = vector.broadcast %67 : vector<6x22xi1> to vector<6x22xi1>
    %69 = arith.xori %65, %68 : vector<6x22xi1>
    %70 = arith.andi %69, %63 : vector<6x22xi1>
    %71 = vector.broadcast %59 : i32 to vector<6x22xi32>
    %72 = arith.addi %61, %71 : vector<6x22xi32>
    %73 = arith.select %70, %72, %61 : vector<6x22xi1>, vector<6x22xi32>
    %cst_28 = arith.constant 0.000000e+00 : f32
    %74 = vector.broadcast %cst_28 : f32 to vector<1x22xf32>
    %75 = tpu.concatenate %74, %56, %74 in 0 : vector<1x22xf32>, vector<6x22xf32>, vector<1x22xf32> -> vector<8x22xf32>
    %76 = vector.extract_strided_slice %75 {offsets = [0, 0], sizes = [6, 22], strides = [1, 1]} : vector<8x22xf32> to vector<6x22xf32>
    %c1_i32_29 = arith.constant 1 : i32
    %77 = vector.broadcast %c1_i32_29 : i32 to vector<6x22xi32>
    %78 = arith.cmpi slt, %73, %77 : vector<6x22xi32>
    %cst_30 = arith.constant 0.000000e+00 : f32
    %79 = vector.broadcast %cst_30 : f32 to vector<6x22xf32>
    %80 = arith.select %78, %79, %76 : vector<6x22xi1>, vector<6x22xf32>
    %81 = vector.extract_strided_slice %75 {offsets = [1, 0], sizes = [6, 22], strides = [1, 1]} : vector<8x22xf32> to vector<6x22xf32>
    %82 = vector.extract_strided_slice %75 {offsets = [2, 0], sizes = [6, 22], strides = [1, 1]} : vector<8x22xf32> to vector<6x22xf32>
    %c2_i32_31 = arith.constant 2 : i32
    %83 = vector.broadcast %c2_i32_31 : i32 to vector<6x22xi32>
    %84 = arith.cmpi sge, %73, %83 : vector<6x22xi32>
    %cst_32 = arith.constant 0.000000e+00 : f32
    %85 = vector.broadcast %cst_32 : f32 to vector<6x22xf32>
    %86 = arith.select %84, %85, %82 : vector<6x22xi1>, vector<6x22xf32>
    %87 = tpu.concatenate %80, %81, %86 in 1 : vector<6x22xf32>, vector<6x22xf32>, vector<6x22xf32> -> vector<6x66xf32>
    %c128 = arith.constant 128 : index
    %c0_33 = arith.constant 0 : index
    %88 = vector.load %arg1[%c128, %c0_33] : memref<368x128xf32, #tpu.memory_space<vmem>>, vector<66x22xf32>
    %cst_34 = arith.constant dense<0.000000e+00> : vector<6x22xf32>
    %89 = tpu.matmul %87, %88, %cst_34 {dimension_numbers = #tpu.dot_dimension_numbers<[1], [0], [0], [1], [0, 0, 1, 1], [], []>} : vector<6x66xf32>, vector<66x22xf32>, vector<6x22xf32> -> vector<6x22xf32>
    %c3 = arith.constant 3 : index
    %c0_35 = arith.constant 0 : index
    %90 = vector.load %arg2[%c3, %c0_35] : memref<8x128xf32, #tpu.memory_space<vmem>>, vector<1x22xf32>
    %91 = vector.broadcast %90 : vector<1x22xf32> to vector<6x22xf32>
    %92 = arith.addf %89, %91 : vector<6x22xf32>
    %cst_36 = arith.constant 0.000000e+00 : f32
    %93 = vector.broadcast %cst_36 : f32 to vector<6x22xf32>
    %94 = arith.maximumf %92, %93 : vector<6x22xf32>
    %c200 = arith.constant 200 : index
    %c0_37 = arith.constant 0 : index
    %95 = vector.load %arg1[%c200, %c0_37] : memref<368x128xf32, #tpu.memory_space<vmem>>, vector<22x36xf32>
    %cst_38 = arith.constant dense<0.000000e+00> : vector<6x36xf32>
    %96 = tpu.matmul %94, %95, %cst_38 {dimension_numbers = #tpu.dot_dimension_numbers<[1], [0], [0], [1], [0, 0, 1, 1], [], []>} : vector<6x22xf32>, vector<22x36xf32>, vector<6x36xf32> -> vector<6x36xf32>
    %97 = vector.extract_strided_slice %96 {offsets = [0, 0], sizes = [6, 12], strides = [1, 1]} : vector<6x36xf32> to vector<6x12xf32>
    %98 = vector.extract_strided_slice %96 {offsets = [0, 12], sizes = [6, 12], strides = [1, 1]} : vector<6x36xf32> to vector<6x12xf32>
    %99 = vector.extract_strided_slice %96 {offsets = [0, 24], sizes = [6, 12], strides = [1, 1]} : vector<6x36xf32> to vector<6x12xf32>
    %100 = tpu.concatenate %97, %98, %99 in 0 : vector<6x12xf32>, vector<6x12xf32>, vector<6x12xf32> -> vector<18x12xf32>
    %c224 = arith.constant 224 : index
    %c0_39 = arith.constant 0 : index
    %101 = vector.load %arg1[%c224, %c0_39] : memref<368x128xf32, #tpu.memory_space<vmem>>, vector<18x18xf32>
    %cst_40 = arith.constant dense<0.000000e+00> : vector<18x12xf32>
    %102 = tpu.matmul %101, %100, %cst_40 {dimension_numbers = #tpu.dot_dimension_numbers<[1], [0], [0], [1], [0, 0, 1, 1], [], []>} : vector<18x18xf32>, vector<18x12xf32>, vector<18x12xf32> -> vector<18x12xf32>
    %c4 = arith.constant 4 : index
    %c0_41 = arith.constant 0 : index
    %103 = vector.load %arg2[%c4, %c0_41] : memref<8x128xf32, #tpu.memory_space<vmem>>, vector<1x12xf32>
    %104 = vector.broadcast %103 : vector<1x12xf32> to vector<18x12xf32>
    %105 = arith.addf %102, %104 : vector<18x12xf32>
    %106 = tpu.iota {dimensions = array<i32: 0>} : vector<18x12xi32>
    %c9_i32 = arith.constant 9 : i32
    %c0_i32_42 = arith.constant 0 : i32
    %107 = arith.cmpi eq, %c9_i32, %c0_i32_42 : i32
    %c1_i32_43 = arith.constant 1 : i32
    %108 = arith.select %107, %c1_i32_43, %c9_i32 : i32
    %109 = vector.broadcast %108 : i32 to vector<18x12xi32>
    %110 = arith.remsi %106, %109 : vector<18x12xi32>
    %c0_i32_44 = arith.constant 0 : i32
    %111 = vector.broadcast %c0_i32_44 : i32 to vector<18x12xi32>
    %112 = arith.cmpi ne, %110, %111 : vector<18x12xi32>
    %c0_i32_45 = arith.constant 0 : i32
    %113 = vector.broadcast %c0_i32_45 : i32 to vector<18x12xi32>
    %114 = arith.cmpi slt, %110, %113 : vector<18x12xi32>
    %c0_i32_46 = arith.constant 0 : i32
    %115 = arith.cmpi slt, %108, %c0_i32_46 : i32
    %116 = vector.broadcast %115 : i1 to vector<18x12xi1>
    %117 = vector.broadcast %116 : vector<18x12xi1> to vector<18x12xi1>
    %118 = arith.xori %114, %117 : vector<18x12xi1>
    %119 = arith.andi %118, %112 : vector<18x12xi1>
    %120 = vector.broadcast %108 : i32 to vector<18x12xi32>
    %121 = arith.addi %110, %120 : vector<18x12xi32>
    %122 = arith.select %119, %121, %110 : vector<18x12xi1>, vector<18x12xi32>
    %cst_47 = arith.constant 0.000000e+00 : f32
    %123 = vector.broadcast %cst_47 : f32 to vector<1x12xf32>
    %124 = tpu.concatenate %123, %105, %123 in 0 : vector<1x12xf32>, vector<18x12xf32>, vector<1x12xf32> -> vector<20x12xf32>
    %125 = vector.extract_strided_slice %124 {offsets = [0, 0], sizes = [18, 12], strides = [1, 1]} : vector<20x12xf32> to vector<18x12xf32>
    %c1_i32_48 = arith.constant 1 : i32
    %126 = vector.broadcast %c1_i32_48 : i32 to vector<18x12xi32>
    %127 = arith.cmpi slt, %122, %126 : vector<18x12xi32>
    %cst_49 = arith.constant 0.000000e+00 : f32
    %128 = vector.broadcast %cst_49 : f32 to vector<18x12xf32>
    %129 = arith.select %127, %128, %125 : vector<18x12xi1>, vector<18x12xf32>
    %130 = vector.extract_strided_slice %124 {offsets = [1, 0], sizes = [18, 12], strides = [1, 1]} : vector<20x12xf32> to vector<18x12xf32>
    %131 = vector.extract_strided_slice %124 {offsets = [2, 0], sizes = [18, 12], strides = [1, 1]} : vector<20x12xf32> to vector<18x12xf32>
    %c8_i32 = arith.constant 8 : i32
    %132 = vector.broadcast %c8_i32 : i32 to vector<18x12xi32>
    %133 = arith.cmpi sge, %122, %132 : vector<18x12xi32>
    %cst_50 = arith.constant 0.000000e+00 : f32
    %134 = vector.broadcast %cst_50 : f32 to vector<18x12xf32>
    %135 = arith.select %133, %134, %131 : vector<18x12xi1>, vector<18x12xf32>
    %136 = tpu.concatenate %129, %130, %135 in 1 : vector<18x12xf32>, vector<18x12xf32>, vector<18x12xf32> -> vector<18x36xf32>
    %c248 = arith.constant 248 : index
    %c0_51 = arith.constant 0 : index
    %137 = vector.load %arg1[%c248, %c0_51] : memref<368x128xf32, #tpu.memory_space<vmem>>, vector<36x12xf32>
    %cst_52 = arith.constant dense<0.000000e+00> : vector<18x12xf32>
    %138 = tpu.matmul %136, %137, %cst_52 {dimension_numbers = #tpu.dot_dimension_numbers<[1], [0], [0], [1], [0, 0, 1, 1], [], []>} : vector<18x36xf32>, vector<36x12xf32>, vector<18x12xf32> -> vector<18x12xf32>
    %c5 = arith.constant 5 : index
    %c0_53 = arith.constant 0 : index
    %139 = vector.load %arg2[%c5, %c0_53] : memref<8x128xf32, #tpu.memory_space<vmem>>, vector<1x12xf32>
    %140 = vector.broadcast %139 : vector<1x12xf32> to vector<18x12xf32>
    %141 = arith.addf %138, %140 : vector<18x12xf32>
    %cst_54 = arith.constant 0.000000e+00 : f32
    %142 = vector.broadcast %cst_54 : f32 to vector<18x12xf32>
    %143 = arith.maximumf %141, %142 : vector<18x12xf32>
    %144 = tpu.iota {dimensions = array<i32: 0>} : vector<18x12xi32>
    %c9_i32_55 = arith.constant 9 : i32
    %c0_i32_56 = arith.constant 0 : i32
    %145 = arith.cmpi eq, %c9_i32_55, %c0_i32_56 : i32
    %c1_i32_57 = arith.constant 1 : i32
    %146 = arith.select %145, %c1_i32_57, %c9_i32_55 : i32
    %147 = vector.broadcast %146 : i32 to vector<18x12xi32>
    %148 = arith.remsi %144, %147 : vector<18x12xi32>
    %c0_i32_58 = arith.constant 0 : i32
    %149 = vector.broadcast %c0_i32_58 : i32 to vector<18x12xi32>
    %150 = arith.cmpi ne, %148, %149 : vector<18x12xi32>
    %c0_i32_59 = arith.constant 0 : i32
    %151 = vector.broadcast %c0_i32_59 : i32 to vector<18x12xi32>
    %152 = arith.cmpi slt, %148, %151 : vector<18x12xi32>
    %c0_i32_60 = arith.constant 0 : i32
    %153 = arith.cmpi slt, %146, %c0_i32_60 : i32
    %154 = vector.broadcast %153 : i1 to vector<18x12xi1>
    %155 = vector.broadcast %154 : vector<18x12xi1> to vector<18x12xi1>
    %156 = arith.xori %152, %155 : vector<18x12xi1>
    %157 = arith.andi %156, %150 : vector<18x12xi1>
    %158 = vector.broadcast %146 : i32 to vector<18x12xi32>
    %159 = arith.addi %148, %158 : vector<18x12xi32>
    %160 = arith.select %157, %159, %148 : vector<18x12xi1>, vector<18x12xi32>
    %cst_61 = arith.constant 0.000000e+00 : f32
    %161 = vector.broadcast %cst_61 : f32 to vector<1x12xf32>
    %162 = tpu.concatenate %161, %143, %161 in 0 : vector<1x12xf32>, vector<18x12xf32>, vector<1x12xf32> -> vector<20x12xf32>
    %163 = vector.extract_strided_slice %162 {offsets = [0, 0], sizes = [18, 12], strides = [1, 1]} : vector<20x12xf32> to vector<18x12xf32>
    %c1_i32_62 = arith.constant 1 : i32
    %164 = vector.broadcast %c1_i32_62 : i32 to vector<18x12xi32>
    %165 = arith.cmpi slt, %160, %164 : vector<18x12xi32>
    %cst_63 = arith.constant 0.000000e+00 : f32
    %166 = vector.broadcast %cst_63 : f32 to vector<18x12xf32>
    %167 = arith.select %165, %166, %163 : vector<18x12xi1>, vector<18x12xf32>
    %168 = vector.extract_strided_slice %162 {offsets = [1, 0], sizes = [18, 12], strides = [1, 1]} : vector<20x12xf32> to vector<18x12xf32>
    %169 = vector.extract_strided_slice %162 {offsets = [2, 0], sizes = [18, 12], strides = [1, 1]} : vector<20x12xf32> to vector<18x12xf32>
    %c8_i32_64 = arith.constant 8 : i32
    %170 = vector.broadcast %c8_i32_64 : i32 to vector<18x12xi32>
    %171 = arith.cmpi sge, %160, %170 : vector<18x12xi32>
    %cst_65 = arith.constant 0.000000e+00 : f32
    %172 = vector.broadcast %cst_65 : f32 to vector<18x12xf32>
    %173 = arith.select %171, %172, %169 : vector<18x12xi1>, vector<18x12xf32>
    %174 = tpu.concatenate %167, %168, %173 in 1 : vector<18x12xf32>, vector<18x12xf32>, vector<18x12xf32> -> vector<18x36xf32>
    %c288 = arith.constant 288 : index
    %c0_66 = arith.constant 0 : index
    %175 = vector.load %arg1[%c288, %c0_66] : memref<368x128xf32, #tpu.memory_space<vmem>>, vector<36x12xf32>
    %cst_67 = arith.constant dense<0.000000e+00> : vector<18x12xf32>
    %176 = tpu.matmul %174, %175, %cst_67 {dimension_numbers = #tpu.dot_dimension_numbers<[1], [0], [0], [1], [0, 0, 1, 1], [], []>} : vector<18x36xf32>, vector<36x12xf32>, vector<18x12xf32> -> vector<18x12xf32>
    %c6 = arith.constant 6 : index
    %c0_68 = arith.constant 0 : index
    %177 = vector.load %arg2[%c6, %c0_68] : memref<8x128xf32, #tpu.memory_space<vmem>>, vector<1x12xf32>
    %178 = vector.broadcast %177 : vector<1x12xf32> to vector<18x12xf32>
    %179 = arith.addf %176, %178 : vector<18x12xf32>
    %cst_69 = arith.constant 0.000000e+00 : f32
    %180 = vector.broadcast %cst_69 : f32 to vector<18x12xf32>
    %181 = arith.maximumf %179, %180 : vector<18x12xf32>
    %182 = tpu.iota {dimensions = array<i32: 0>} : vector<18x12xi32>
    %c9_i32_70 = arith.constant 9 : i32
    %c0_i32_71 = arith.constant 0 : i32
    %183 = arith.cmpi eq, %c9_i32_70, %c0_i32_71 : i32
    %c1_i32_72 = arith.constant 1 : i32
    %184 = arith.select %183, %c1_i32_72, %c9_i32_70 : i32
    %185 = vector.broadcast %184 : i32 to vector<18x12xi32>
    %186 = arith.remsi %182, %185 : vector<18x12xi32>
    %c0_i32_73 = arith.constant 0 : i32
    %187 = vector.broadcast %c0_i32_73 : i32 to vector<18x12xi32>
    %188 = arith.cmpi ne, %186, %187 : vector<18x12xi32>
    %c0_i32_74 = arith.constant 0 : i32
    %189 = vector.broadcast %c0_i32_74 : i32 to vector<18x12xi32>
    %190 = arith.cmpi slt, %186, %189 : vector<18x12xi32>
    %c0_i32_75 = arith.constant 0 : i32
    %191 = arith.cmpi slt, %184, %c0_i32_75 : i32
    %192 = vector.broadcast %191 : i1 to vector<18x12xi1>
    %193 = vector.broadcast %192 : vector<18x12xi1> to vector<18x12xi1>
    %194 = arith.xori %190, %193 : vector<18x12xi1>
    %195 = arith.andi %194, %188 : vector<18x12xi1>
    %196 = vector.broadcast %184 : i32 to vector<18x12xi32>
    %197 = arith.addi %186, %196 : vector<18x12xi32>
    %198 = arith.select %195, %197, %186 : vector<18x12xi1>, vector<18x12xi32>
    %cst_76 = arith.constant 0.000000e+00 : f32
    %199 = vector.broadcast %cst_76 : f32 to vector<1x12xf32>
    %200 = tpu.concatenate %199, %181, %199 in 0 : vector<1x12xf32>, vector<18x12xf32>, vector<1x12xf32> -> vector<20x12xf32>
    %201 = vector.extract_strided_slice %200 {offsets = [0, 0], sizes = [18, 12], strides = [1, 1]} : vector<20x12xf32> to vector<18x12xf32>
    %c1_i32_77 = arith.constant 1 : i32
    %202 = vector.broadcast %c1_i32_77 : i32 to vector<18x12xi32>
    %203 = arith.cmpi slt, %198, %202 : vector<18x12xi32>
    %cst_78 = arith.constant 0.000000e+00 : f32
    %204 = vector.broadcast %cst_78 : f32 to vector<18x12xf32>
    %205 = arith.select %203, %204, %201 : vector<18x12xi1>, vector<18x12xf32>
    %206 = vector.extract_strided_slice %200 {offsets = [1, 0], sizes = [18, 12], strides = [1, 1]} : vector<20x12xf32> to vector<18x12xf32>
    %207 = vector.extract_strided_slice %200 {offsets = [2, 0], sizes = [18, 12], strides = [1, 1]} : vector<20x12xf32> to vector<18x12xf32>
    %c8_i32_79 = arith.constant 8 : i32
    %208 = vector.broadcast %c8_i32_79 : i32 to vector<18x12xi32>
    %209 = arith.cmpi sge, %198, %208 : vector<18x12xi32>
    %cst_80 = arith.constant 0.000000e+00 : f32
    %210 = vector.broadcast %cst_80 : f32 to vector<18x12xf32>
    %211 = arith.select %209, %210, %207 : vector<18x12xi1>, vector<18x12xf32>
    %212 = tpu.concatenate %205, %206, %211 in 1 : vector<18x12xf32>, vector<18x12xf32>, vector<18x12xf32> -> vector<18x36xf32>
    %c328 = arith.constant 328 : index
    %c0_81 = arith.constant 0 : index
    %213 = vector.load %arg1[%c328, %c0_81] : memref<368x128xf32, #tpu.memory_space<vmem>>, vector<36x1xf32>
    %cst_82 = arith.constant dense<0.000000e+00> : vector<18x1xf32>
    %214 = tpu.matmul %212, %213, %cst_82 {dimension_numbers = #tpu.dot_dimension_numbers<[1], [0], [0], [1], [0, 0, 1, 1], [], []>} : vector<18x36xf32>, vector<36x1xf32>, vector<18x1xf32> -> vector<18x1xf32>
    %c7 = arith.constant 7 : index
    %c0_83 = arith.constant 0 : index
    %215 = vector.load %arg2[%c7, %c0_83] : memref<8x128xf32, #tpu.memory_space<vmem>>, vector<1x1xf32>
    %216 = vector.broadcast %215 : vector<1x1xf32> to vector<18x1xf32>
    %217 = arith.addf %214, %216 : vector<18x1xf32>
    %c0_84 = arith.constant 0 : index
    %c0_85 = arith.constant 0 : index
    %218 = vector.load %arg3[%c0_84, %c0_85] : memref<18x1xf32, #tpu.memory_space<vmem>>, vector<18x1xf32>
    tpu.vector_store %arg3[%c0_84, %c0_85], %217 {strides = array<i32>} : memref<18x1xf32, #tpu.memory_space<vmem>>, vector<18x1xf32>,
    return
  }
}

</mosaic_0001>

<llo_original>
// kernel: tpu_custom_call.1
$region0: #{tpu_custom_call.1}
  #allocation0 [shape = 'u32[]', space=smem, size = 0x4, offset = 0x4, fixed_abs, tag = 'smem constant byte address 0x4 - core index']
  #allocation1 [shape = 'u32[144,128]{1,0:T(1,128)}', space=vmem, size = 0x12000, scoped, tag = 'internal scratch']
  %s0 = inlined_call_operand.hbm [shape: f32[2,16], index: 0, kind: input, shape index: {}]
  %s1 = inlined_call_operand.hbm [shape: f32[368,128], index: 1, kind: input, shape index: {}]
  %s2 = inlined_call_operand.hbm [shape: f32[8,128], index: 2, kind: input, shape index: {}]
  %s3 = inlined_call_operand.vmem [shape: f32[18,1], index: 3, kind: output, shape index: {}]
  %s4 = sld [smem:[#allocation0]]
  $region34: #{tpu_custom_call.1} parent=0
    _
  %s6 = ssub.s32 1, %s4
  %s7 = scalar_select 0, %s6, %s4
  $region1: #{tpu_custom_call.1} parent=0
    #allocation2 [shape = 'u8[1024]{0}', space=vmem, size = 0x400, scoped, tag = 'input window, operand 0, single buffered']
    #allocation3 [shape = 's32[1]{0}', space=sflag, size = 0x4, scoped, tag = 'scoped memory for tpu_custom_call.1']
    #allocation4 [shape = 'u8[188416]{0}', space=vmem, size = 0x2e000, scoped, tag = 'input window, operand 1, single buffered']
    #allocation5 [shape = 's32[1]{0}', space=sflag, size = 0x4, scoped, tag = 'scoped memory for tpu_custom_call.1']
    #allocation6 [shape = 'u8[4096]{0}', space=vmem, size = 0x1000, scoped, tag = 'input window, operand 2, single buffered']
    %8 = vsyncpa [#allocation3], 0
    %9 = vsyncpa [#allocation5], 0
    // Predicated region
    $region2: #{tpu_custom_call.1} parent=1 // pred_check
      _
    $region3: #{tpu_custom_call.1} parent=1 // pred_check_branch
      %11 = sbr.rel (0) target = $region5
    $region4: #{tpu_custom_call.1} parent=1 // pred_region
      %s13 = ssub.s32 32, 32
      %14 = vsyncadd [#allocation3], %s13
      %s16 = sshll.u32 [#allocation2], 4
      %s17 = int_to_ptr.vmem [resolvable:$true] %s16
      %19 = dma.hbm_to_vmem [thread:$0]  %s0, 32, %s17, [#allocation3]
    $region5: #{tpu_custom_call.1} parent=1 // pred_fallthru
      _
    // Predicated region
    $region6: #{tpu_custom_call.1} parent=1 // pred_check
      _
    $region7: #{tpu_custom_call.1} parent=1 // pred_check_branch
      %21 = sbr.rel (0) target = $region9
    $region8: #{tpu_custom_call.1} parent=1 // pred_region
      %s23 = ssub.s32 5888, 5888
      %24 = vsyncadd [#allocation5], %s23
      %s25 = sshll.u32 [#allocation4], 4
      %s26 = int_to_ptr.vmem [resolvable:$true] %s25
      %31 = dma.hbm_to_vmem [thread:$0]  %s1, 5888, %s26, [#allocation5], 128, 128, 8
    $region9: #{tpu_custom_call.1} parent=1 // pred_fallthru
      _
    // Predicated region
    $region10: #{tpu_custom_call.1} parent=1 // pred_check
      _
    $region11: #{tpu_custom_call.1} parent=1 // pred_check_branch
      %33 = sbr.rel (0) target = $region13
    $region12: #{tpu_custom_call.1} parent=1 // pred_region
      %s35 = ssub.s32 128, 128
      %36 = vsyncadd [#allocation5], %s35
      %s38 = sshll.u32 [#allocation6], 4
      %s39 = int_to_ptr.vmem [resolvable:$true] %s38
      %41 = dma.hbm_to_vmem [thread:$0]  %s2, 128, %s39, [#allocation5]
    $region13: #{tpu_custom_call.1} parent=1 // pred_fallthru
      _
    // Predicated region
    $region14: #{tpu_custom_call.1} parent=1 // pred_check
      _
    $region15: #{tpu_custom_call.1} parent=1 // pred_check_branch
      %43 = sbr.rel (0) target = $region17
    $region16: #{tpu_custom_call.1} parent=1 // pred_region
      %44 = dma.done [#allocation3], 32
    $region17: #{tpu_custom_call.1} parent=1 // pred_fallthru
      _
    // Predicated region
    $region18: #{tpu_custom_call.1} parent=1 // pred_check
      _
    $region19: #{tpu_custom_call.1} parent=1 // pred_check_branch
      %46 = sbr.rel (0) target = $region21
    $region20: #{tpu_custom_call.1} parent=1 // pred_region
      %47 = dma.done [#allocation5], 5888
    $region21: #{tpu_custom_call.1} parent=1 // pred_fallthru
      _
    // Predicated region
    $region22: #{tpu_custom_call.1} parent=1 // pred_check
      _
    $region23: #{tpu_custom_call.1} parent=1 // pred_check_branch
      %49 = sbr.rel (0) target = $region25
    $region24: #{tpu_custom_call.1} parent=1 // pred_region
      %50 = dma.done [#allocation5], 128
    $region25: #{tpu_custom_call.1} parent=1 // pred_fallthru
      _
    %v51 = vld [vmem:[#allocation2] sm:$0x3]
    %v52 = vld [vmem:[#allocation4] sm:$0xff]
    %v53 = vld [vmem:[#allocation4 + $0x8] sm:$0xff]
    %v54 = vld [vmem:[#allocation6] sm:$0x1]
    %v55 = vlaneseq
    %v56 = vshrl.u32 %v55, 7
    %v57 = vsub.s32 0, %v56
    %v58 = vrot.slane %v54, %v57
    %vm59 = vcmask 130048
    %v61 = vsel %vm59, %v51, 0
    %63 = vmatprep.subr.mxu0 0.0
    %64 = vmatpush1.msra.mxu0 %v52
    %65 = vmatprep.subr.mxu0 0.0
    %66 = vmatpush1.msra.mxu0 %v53
    %67 = vmatprep.subr.mxu0 0.0
    %68 = vmatpush1.msra.mxu0 0.0
    %69 = vmatprep.subr.mxu0 0.0
    %70 = vmatpush1.msra.mxu0 0.0
    %71 = vmatprep.subr.mxu0 0.0
    %72 = vmatpush1.msra.mxu0 0.0
    %73 = vmatprep.subr.mxu0 0.0
    %74 = vmatpush1.msra.mxu0 0.0
    %75 = vmatprep.subr.mxu0 0.0
    %76 = vmatpush1.msra.mxu0 0.0
    %77 = vmatprep.subr.mxu0 0.0
    %78 = vmatpush1.msra.mxu0 0.0
    %79 = vmatprep.subr.mxu0 0.0
    %80 = vmatpush1.msra.mxu0 0.0
    %81 = vmatprep.subr.mxu0 0.0
    %82 = vmatpush1.msra.mxu0 0.0
    %83 = vmatprep.subr.mxu0 0.0
    %84 = vmatpush1.msra.mxu0 0.0
    %85 = vmatprep.subr.mxu0 0.0
    %86 = vmatpush1.msra.mxu0 0.0
    %87 = vmatprep.subr.mxu0 0.0
    %88 = vmatpush1.msra.mxu0 0.0
    %89 = vmatprep.subr.mxu0 0.0
    %90 = vmatpush1.msra.mxu0 0.0
    %91 = vmatprep.subr.mxu0 0.0
    %92 = vmatpush1.msra.mxu0 0.0
    %93 = vmatprep.subr.mxu0 0.0
    %94 = vmatpush1.msra.mxu0 0.0
    %95 = vmatprep.subr.mxu0 0.0
    %96 = vmatpush1.msra.mxu0 0.0
    %97 = vmatprep.subr.mxu0 0.0
    %98 = vmatpush1.msra.mxu0 0.0
    %99 = vmatprep.subr.mxu0 0.0
    %100 = vmatpush1.msra.mxu0 0.0
    %101 = vmatprep.subr.mxu0 0.0
    %102 = vmatpush1.msra.mxu0 0.0
    %103 = vmatprep.subr.mxu0 0.0
    %104 = vmatpush1.msra.mxu0 0.0
    %105 = vmatprep.subr.mxu0 0.0
    %106 = vmatpush1.msra.mxu0 0.0
    %107 = vmatprep.subr.mxu0 0.0
    %108 = vmatpush1.msra.mxu0 0.0
    %109 = vmatprep.subr.mxu0 0.0
    %110 = vmatpush1.msra.mxu0 0.0
    %111 = vmatprep.subr.mxu0 0.0
    %112 = vmatpush1.msra.mxu0 0.0
    %113 = vmatprep.subr.mxu0 0.0
    %114 = vmatpush1.msra.mxu0 0.0
    %115 = vmatprep.subr.mxu0 0.0
    %116 = vmatpush1.msra.mxu0 0.0
    %117 = vmatprep.subr.mxu0 0.0
    %118 = vmatpush1.msra.mxu0 0.0
    %119 = vmatprep.subr.mxu0 0.0
    %120 = vmatpush1.msra.mxu0 0.0
    %121 = vmatprep.subr.mxu0 0.0
    %122 = vmatpush1.msra.mxu0 0.0
    %123 = vmatprep.subr.mxu0 0.0
    %124 = vmatpush1.msra.mxu0 0.0
    %125 = vmatprep.subr.mxu0 0.0
    %126 = vmatpush1.msra.mxu0 0.0
    %127 = vmatprep.mubr.f32.mxu0 0.0
    %128 = vmatmul.mubr.f32.gmra.mrb[0].mxu0 %v61
    %v129 = vpop.f32.mrb[0].mxu0
    %v130 = vadd.f32 %v58, %v129
    %v131 = vpop.f32.mrb[0].mxu0
    %132 = vdwg.mxu0
    %v133 = vmax.f32 %v130, 0.0
    %v134 = vld [vmem:[#allocation4 + $0x10] sm:$0xff]
    %v135 = vld [vmem:[#allocation4 + $0x18] sm:$0xff]
    %v136 = vld [vmem:[#allocation4 + $0x20] sm:$0xff]
    %v137 = vld [vmem:[#allocation4 + $0x28] sm:$0xff]
    %vm138 = vcmask 261120
    %v140 = vsel %vm138, %v133, 0
    %142 = vmatprep.subr.mxu0 0.0
    %143 = vmatpush1.msra.mxu0 %v134
    %144 = vmatprep.subr.mxu0 0.0
    %145 = vmatpush1.msra.mxu0 %v135
    %146 = vmatprep.subr.mxu0 0.0
    %147 = vmatpush1.msra.mxu0 %v136
    %148 = vmatprep.subr.mxu0 0.0
    %149 = vmatpush1.msra.mxu0 %v137
    %150 = vmatprep.subr.mxu0 0.0
    %151 = vmatpush1.msra.mxu0 0.0
    %152 = vmatprep.subr.mxu0 0.0
    %153 = vmatpush1.msra.mxu0 0.0
    %154 = vmatprep.subr.mxu0 0.0
    %155 = vmatpush1.msra.mxu0 0.0
    %156 = vmatprep.subr.mxu0 0.0
    %157 = vmatpush1.msra.mxu0 0.0
    %158 = vmatprep.subr.mxu0 0.0
    %159 = vmatpush1.msra.mxu0 0.0
    %160 = vmatprep.subr.mxu0 0.0
    %161 = vmatpush1.msra.mxu0 0.0
    %162 = vmatprep.subr.mxu0 0.0
    %163 = vmatpush1.msra.mxu0 0.0
    %164 = vmatprep.subr.mxu0 0.0
    %165 = vmatpush1.msra.mxu0 0.0
    %166 = vmatprep.subr.mxu0 0.0
    %167 = vmatpush1.msra.mxu0 0.0
    %168 = vmatprep.subr.mxu0 0.0
    %169 = vmatpush1.msra.mxu0 0.0
    %170 = vmatprep.subr.mxu0 0.0
    %171 = vmatpush1.msra.mxu0 0.0
    %172 = vmatprep.subr.mxu0 0.0
    %173 = vmatpush1.msra.mxu0 0.0
    %174 = vmatprep.subr.mxu0 0.0
    %175 = vmatpush1.msra.mxu0 0.0
    %176 = vmatprep.subr.mxu0 0.0
    %177 = vmatpush1.msra.mxu0 0.0
    %178 = vmatprep.subr.mxu0 0.0
    %179 = vmatpush1.msra.mxu0 0.0
    %180 = vmatprep.subr.mxu0 0.0
    %181 = vmatpush1.msra.mxu0 0.0
    %182 = vmatprep.subr.mxu0 0.0
    %183 = vmatpush1.msra.mxu0 0.0
    %184 = vmatprep.subr.mxu0 0.0
    %185 = vmatpush1.msra.mxu0 0.0
    %186 = vmatprep.subr.mxu0 0.0
    %187 = vmatpush1.msra.mxu0 0.0
    %188 = vmatprep.subr.mxu0 0.0
    %189 = vmatpush1.msra.mxu0 0.0
    %190 = vmatprep.subr.mxu0 0.0
    %191 = vmatpush1.msra.mxu0 0.0
    %192 = vmatprep.subr.mxu0 0.0
    %193 = vmatpush1.msra.mxu0 0.0
    %194 = vmatprep.subr.mxu0 0.0
    %195 = vmatpush1.msra.mxu0 0.0
    %196 = vmatprep.subr.mxu0 0.0
    %197 = vmatpush1.msra.mxu0 0.0
    %198 = vmatprep.subr.mxu0 0.0
    %199 = vmatpush1.msra.mxu0 0.0
    %200 = vmatprep.subr.mxu0 0.0
    %201 = vmatpush1.msra.mxu0 0.0
    %202 = vmatprep.subr.mxu0 0.0
    %203 = vmatpush1.msra.mxu0 0.0
    %204 = vmatprep.subr.mxu0 0.0
    %205 = vmatpush1.msra.mxu0 0.0
    %206 = vmatprep.mubr.f32.mxu0 0.0
    %207 = vmatmul.mubr.f32.gmra.mrb[0].mxu0 %v140
    %v208 = vpop.f32.mrb[0].mxu0
    %v209 = vadd.f32 0.0, %v208
    %v210 = vpop.f32.mrb[0].mxu0
    %211 = vdwg.mxu0
    %v213 = vrot.slane %v209, 6
    %214 = vrot.lane.b32.xlu0 %v213, 106
    %v215 = vpop.permute.xlu0 %214
    %v217 = vrot.slane %v209, 4
    %218 = vrot.lane.b32.xlu0 %v217, 84
    %v219 = vpop.permute.xlu0 %218
    %vm221 = vcmask 1041408
    %v222 = vsel %vm221, %v209, %v215
    %vm223 = vcmask 1043456
    %v224 = vsel %vm223, %v222, %v219
    %v225 = vld [vmem:[#allocation4 + $0x30] sm:$0x3f]
    %v226 = vld [vmem:[#allocation6 + $0x1] sm:$0x1]
    %v227 = vlaneseq
    %v228 = vshrl.u32 %v227, 7
    %v229 = vsub.s32 0, %v228
    %v230 = vrot.slane %v226, %v229
    %vm231 = vcmask 48128
    %v233 = vsel %vm231, %v225, 0
    %vm235 = vcmask 1045504
    %v237 = vsel %vm235, %v224, 0
    %239 = vmatprep.subr.mxu0 0.0
    %240 = vmatpush1.msra.mxu0 %v237
    %241 = vmatprep.subr.mxu0 0.0
    %242 = vmatpush1.msra.mxu0 0.0
    %243 = vmatprep.subr.mxu0 0.0
    %244 = vmatpush1.msra.mxu0 0.0
    %245 = vmatprep.subr.mxu0 0.0
    %246 = vmatpush1.msra.mxu0 0.0
    %247 = vmatprep.subr.mxu0 0.0
    %248 = vmatpush1.msra.mxu0 0.0
    %249 = vmatprep.subr.mxu0 0.0
    %250 = vmatpush1.msra.mxu0 0.0
    %251 = vmatprep.subr.mxu0 0.0
    %252 = vmatpush1.msra.mxu0 0.0
    %253 = vmatprep.subr.mxu0 0.0
    %254 = vmatpush1.msra.mxu0 0.0
    %255 = vmatprep.subr.mxu0 0.0
    %256 = vmatpush1.msra.mxu0 0.0
    %257 = vmatprep.subr.mxu0 0.0
    %258 = vmatpush1.msra.mxu0 0.0
    %259 = vmatprep.subr.mxu0 0.0
    %260 = vmatpush1.msra.mxu0 0.0
    %261 = vmatprep.subr.mxu0 0.0
    %262 = vmatpush1.msra.mxu0 0.0
    %263 = vmatprep.subr.mxu0 0.0
    %264 = vmatpush1.msra.mxu0 0.0
    %265 = vmatprep.subr.mxu0 0.0
    %266 = vmatpush1.msra.mxu0 0.0
    %267 = vmatprep.subr.mxu0 0.0
    %268 = vmatpush1.msra.mxu0 0.0
    %269 = vmatprep.subr.mxu0 0.0
    %270 = vmatpush1.msra.mxu0 0.0
    %271 = vmatprep.subr.mxu0 0.0
    %272 = vmatpush1.msra.mxu0 0.0
    %273 = vmatprep.subr.mxu0 0.0
    %274 = vmatpush1.msra.mxu0 0.0
    %275 = vmatprep.subr.mxu0 0.0
    %276 = vmatpush1.msra.mxu0 0.0
    %277 = vmatprep.subr.mxu0 0.0
    %278 = vmatpush1.msra.mxu0 0.0
    %279 = vmatprep.subr.mxu0 0.0
    %280 = vmatpush1.msra.mxu0 0.0
    %281 = vmatprep.subr.mxu0 0.0
    %282 = vmatpush1.msra.mxu0 0.0
    %283 = vmatprep.subr.mxu0 0.0
    %284 = vmatpush1.msra.mxu0 0.0
    %285 = vmatprep.subr.mxu0 0.0
    %286 = vmatpush1.msra.mxu0 0.0
    %287 = vmatprep.subr.mxu0 0.0
    %288 = vmatpush1.msra.mxu0 0.0
    %289 = vmatprep.subr.mxu0 0.0
    %290 = vmatpush1.msra.mxu0 0.0
    %291 = vmatprep.subr.mxu0 0.0
    %292 = vmatpush1.msra.mxu0 0.0
    %293 = vmatprep.subr.mxu0 0.0
    %294 = vmatpush1.msra.mxu0 0.0
    %295 = vmatprep.subr.mxu0 0.0
    %296 = vmatpush1.msra.mxu0 0.0
    %297 = vmatprep.subr.mxu0 0.0
    %298 = vmatpush1.msra.mxu0 0.0
    %299 = vmatprep.subr.mxu0 0.0
    %300 = vmatpush1.msra.mxu0 0.0
    %301 = vmatprep.subr.mxu0 0.0
    %302 = vmatpush1.msra.mxu0 0.0
    %303 = vmatprep.mubr.f32.mxu0 0.0
    %304 = vmatmul.mubr.f32.gmra.mrb[0].mxu0 %v233
    %v305 = vpop.f32.mrb[0].mxu0
    %v306 = vadd.f32 %v230, %v305
    %v307 = vpop.f32.mrb[0].mxu0
    %308 = vdwg.mxu0
    %v309 = vlaneseq
    %v310 = vshrl.u32 %v309, 7
    %vm311 = vcmp.lt.s32.totalorder %v310, 0
    %v312 = vsub.s32 0, %v310
    %v313 = vsel %vm311, %v312, %v310
    %v314 = vmul.u32.u64.compose %v313, 2863311531
    %v315 = vextract.low.u32 %v314
    %v316 = vextract.high.u32 %v314
    %v317 = vshrl.u32 %v316, 1
    %v318 = vmul.u32 %v317, 3
    %v319 = vsub.s32 %v313, %v318
    %v320 = vsub.s32 0, %v319
    %v321 = vsel %vm311, %v320, %v319
    %vm322 = vcmp.ne.s32.totalorder %v321, 0
    %vm323 = vcmp.lt.s32.totalorder %v321, 0
    %vm324 = vmand %vm323, %vm322
    %v325 = vadd.s32 %v321, 3
    %v326 = vsel %vm324, %v325, %v321
    %v328 = vrot.slane %v306, 7
    %vm330 = vcmask 1040384
    %v331 = vsel %vm330, 0.0, %v328
    %vm332 = vcmask 1046528
    %v333 = vsel %vm332, %v331, 0.0
    %vm334 = vcmp.lt.s32.totalorder %v326, 1
    %v335 = vsel %vm334, 0.0, %v333
    %vm336 = vcmp.ge.s32.totalorder %v326, 2
    %v338 = vrot.slane %v333, 2
    %v340 = vsel %vm336, 0.0, %v338
    %v341 = vrot.slane %v333, 1
    %342 = vrot.lane.b32.xlu0 %v341, 22
    %v343 = vpop.permute.xlu0 %342
    %346 = vrot.lane.b32.xlu0 %v340, 44
    %v347 = vpop.permute.xlu0 %346
    %vm349 = vcmask 179200
    %v350 = vsel %vm349, %v335, %v343
    %vm351 = vcmask 359424
    %v352 = vsel %vm351, %v350, %v347
    %v353 = vld [vmem:[#allocation4 + $0x38] sm:$0xff]
    %v354 = vld [vmem:[#allocation4 + $0x40] sm:$0xff]
    %v355 = vld [vmem:[#allocation4 + $0x48] sm:$0xff]
    %v356 = vld [vmem:[#allocation4 + $0x50] sm:$0xff]
    %v357 = vld [vmem:[#allocation4 + $0x58] sm:$0xff]
    %v358 = vld [vmem:[#allocation4 + $0x60] sm:$0xff]
    %v359 = vld [vmem:[#allocation4 + $0x68] sm:$0xff]
    %v360 = vld [vmem:[#allocation4 + $0x70] sm:$0xff]
    %v361 = vld [vmem:[#allocation4 + $0x78] sm:$0x3]
    %v362 = vld [vmem:[#allocation6 + $0x2] sm:$0x1]
    %v363 = vlaneseq
    %v364 = vshrl.u32 %v363, 7
    %v365 = vsub.s32 0, %v364
    %v366 = vrot.slane %v362, %v365
    %vm367 = vcmask 539648
    %v369 = vsel %vm367, %v352, 0
    %v372 = vsel %vm221, %v361, 0
    %374 = vmatprep.subr.mxu0 0.0
    %375 = vmatpush1.msra.mxu0 %v353
    %376 = vmatprep.subr.mxu0 0.0
    %377 = vmatpush1.msra.mxu0 %v354
    %378 = vmatprep.subr.mxu0 0.0
    %379 = vmatpush1.msra.mxu0 %v355
    %380 = vmatprep.subr.mxu0 0.0
    %381 = vmatpush1.msra.mxu0 %v356
    %382 = vmatprep.subr.mxu0 0.0
    %383 = vmatpush1.msra.mxu0 %v357
    %384 = vmatprep.subr.mxu0 0.0
    %385 = vmatpush1.msra.mxu0 %v358
    %386 = vmatprep.subr.mxu0 0.0
    %387 = vmatpush1.msra.mxu0 %v359
    %388 = vmatprep.subr.mxu0 0.0
    %389 = vmatpush1.msra.mxu0 %v360
    %390 = vmatprep.subr.mxu0 0.0
    %391 = vmatpush1.msra.mxu0 %v372
    %392 = vmatprep.subr.mxu0 0.0
    %393 = vmatpush1.msra.mxu0 0.0
    %394 = vmatprep.subr.mxu0 0.0
    %395 = vmatpush1.msra.mxu0 0.0
    %396 = vmatprep.subr.mxu0 0.0
    %397 = vmatpush1.msra.mxu0 0.0
    %398 = vmatprep.subr.mxu0 0.0
    %399 = vmatpush1.msra.mxu0 0.0
    %400 = vmatprep.subr.mxu0 0.0
    %401 = vmatpush1.msra.mxu0 0.0
    %402 = vmatprep.subr.mxu0 0.0
    %403 = vmatpush1.msra.mxu0 0.0
    %404 = vmatprep.subr.mxu0 0.0
    %405 = vmatpush1.msra.mxu0 0.0
    %406 = vmatprep.subr.mxu0 0.0
    %407 = vmatpush1.msra.mxu0 0.0
    %408 = vmatprep.subr.mxu0 0.0
    %409 = vmatpush1.msra.mxu0 0.0
    %410 = vmatprep.subr.mxu0 0.0
    %411 = vmatpush1.msra.mxu0 0.0
    %412 = vmatprep.subr.mxu0 0.0
    %413 = vmatpush1.msra.mxu0 0.0
    %414 = vmatprep.subr.mxu0 0.0
    %415 = vmatpush1.msra.mxu0 0.0
    %416 = vmatprep.subr.mxu0 0.0
    %417 = vmatpush1.msra.mxu0 0.0
    %418 = vmatprep.subr.mxu0 0.0
    %419 = vmatpush1.msra.mxu0 0.0
    %420 = vmatprep.subr.mxu0 0.0
    %421 = vmatpush1.msra.mxu0 0.0
    %422 = vmatprep.subr.mxu0 0.0
    %423 = vmatpush1.msra.mxu0 0.0
    %424 = vmatprep.subr.mxu0 0.0
    %425 = vmatpush1.msra.mxu0 0.0
    %426 = vmatprep.subr.mxu0 0.0
    %427 = vmatpush1.msra.mxu0 0.0
    %428 = vmatprep.subr.mxu0 0.0
    %429 = vmatpush1.msra.mxu0 0.0
    %430 = vmatprep.subr.mxu0 0.0
    %431 = vmatpush1.msra.mxu0 0.0
    %432 = vmatprep.subr.mxu0 0.0
    %433 = vmatpush1.msra.mxu0 0.0
    %434 = vmatprep.subr.mxu0 0.0
    %435 = vmatpush1.msra.mxu0 0.0
    %436 = vmatprep.subr.mxu0 0.0
    %437 = vmatpush1.msra.mxu0 0.0
    %438 = vmatprep.mubr.f32.mxu0 0.0
    %439 = vmatmul.mubr.f32.gmra.mrb[0].mxu0 %v369
    %v440 = vpop.f32.mrb[0].mxu0
    %v441 = vadd.f32 %v366, %v440
    %v442 = vpop.f32.mrb[0].mxu0
    %443 = vdwg.mxu0
    %v444 = vmax.f32 %v441, 0.0
    %v446 = vrot.slane %v444, 7
    %v448 = vsel %vm330, 0.0, %v446
    %v449 = vsel %vm332, %v448, 0.0
    %v450 = vsel %vm334, 0.0, %v449
    %v452 = vrot.slane %v449, 2
    %v454 = vsel %vm336, 0.0, %v452
    %v455 = vrot.slane %v449, 1
    %456 = vrot.lane.b32.xlu0 %v455, 22
    %v457 = vpop.permute.xlu0 %456
    %460 = vrot.lane.b32.xlu0 %v454, 44
    %v461 = vpop.permute.xlu0 %460
    %v463 = vsel %vm349, %v450, %v457
    %v464 = vsel %vm351, %v463, %v461
    %v465 = vld [vmem:[#allocation4 + $0x80] sm:$0xff]
    %v466 = vld [vmem:[#allocation4 + $0x88] sm:$0xff]
    %v467 = vld [vmem:[#allocation4 + $0x90] sm:$0xff]
    %v468 = vld [vmem:[#allocation4 + $0x98] sm:$0xff]
    %v469 = vld [vmem:[#allocation4 + $0xa0] sm:$0xff]
    %v470 = vld [vmem:[#allocation4 + $0xa8] sm:$0xff]
    %v471 = vld [vmem:[#allocation4 + $0xb0] sm:$0xff]
    %v472 = vld [vmem:[#allocation4 + $0xb8] sm:$0xff]
    %v473 = vld [vmem:[#allocation4 + $0xc0] sm:$0x3]
    %v474 = vld [vmem:[#allocation6 + $0x3] sm:$0x1]
    %v475 = vlaneseq
    %v476 = vshrl.u32 %v475, 7
    %v477 = vsub.s32 0, %v476
    %v478 = vrot.slane %v474, %v477
    %v480 = vsel %vm367, %v464, 0
    %v483 = vsel %vm221, %v473, 0
    %485 = vmatprep.subr.mxu0 0.0
    %486 = vmatpush1.msra.mxu0 %v465
    %487 = vmatprep.subr.mxu0 0.0
    %488 = vmatpush1.msra.mxu0 %v466
    %489 = vmatprep.subr.mxu0 0.0
    %490 = vmatpush1.msra.mxu0 %v467
    %491 = vmatprep.subr.mxu0 0.0
    %492 = vmatpush1.msra.mxu0 %v468
    %493 = vmatprep.subr.mxu0 0.0
    %494 = vmatpush1.msra.mxu0 %v469
    %495 = vmatprep.subr.mxu0 0.0
    %496 = vmatpush1.msra.mxu0 %v470
    %497 = vmatprep.subr.mxu0 0.0
    %498 = vmatpush1.msra.mxu0 %v471
    %499 = vmatprep.subr.mxu0 0.0
    %500 = vmatpush1.msra.mxu0 %v472
    %501 = vmatprep.subr.mxu0 0.0
    %502 = vmatpush1.msra.mxu0 %v483
    %503 = vmatprep.subr.mxu0 0.0
    %504 = vmatpush1.msra.mxu0 0.0
    %505 = vmatprep.subr.mxu0 0.0
    %506 = vmatpush1.msra.mxu0 0.0
    %507 = vmatprep.subr.mxu0 0.0
    %508 = vmatpush1.msra.mxu0 0.0
    %509 = vmatprep.subr.mxu0 0.0
    %510 = vmatpush1.msra.mxu0 0.0
    %511 = vmatprep.subr.mxu0 0.0
    %512 = vmatpush1.msra.mxu0 0.0
    %513 = vmatprep.subr.mxu0 0.0
    %514 = vmatpush1.msra.mxu0 0.0
    %515 = vmatprep.subr.mxu0 0.0
    %516 = vmatpush1.msra.mxu0 0.0
    %517 = vmatprep.subr.mxu0 0.0
    %518 = vmatpush1.msra.mxu0 0.0
    %519 = vmatprep.subr.mxu0 0.0
    %520 = vmatpush1.msra.mxu0 0.0
    %521 = vmatprep.subr.mxu0 0.0
    %522 = vmatpush1.msra.mxu0 0.0
    %523 = vmatprep.subr.mxu0 0.0
    %524 = vmatpush1.msra.mxu0 0.0
    %525 = vmatprep.subr.mxu0 0.0
    %526 = vmatpush1.msra.mxu0 0.0
    %527 = vmatprep.subr.mxu0 0.0
    %528 = vmatpush1.msra.mxu0 0.0
    %529 = vmatprep.subr.mxu0 0.0
    %530 = vmatpush1.msra.mxu0 0.0
    %531 = vmatprep.subr.mxu0 0.0
    %532 = vmatpush1.msra.mxu0 0.0
    %533 = vmatprep.subr.mxu0 0.0
    %534 = vmatpush1.msra.mxu0 0.0
    %535 = vmatprep.subr.mxu0 0.0
    %536 = vmatpush1.msra.mxu0 0.0
    %537 = vmatprep.subr.mxu0 0.0
    %538 = vmatpush1.msra.mxu0 0.0
    %539 = vmatprep.subr.mxu0 0.0
    %540 = vmatpush1.msra.mxu0 0.0
    %541 = vmatprep.subr.mxu0 0.0
    %542 = vmatpush1.msra.mxu0 0.0
    %543 = vmatprep.subr.mxu0 0.0
    %544 = vmatpush1.msra.mxu0 0.0
    %545 = vmatprep.subr.mxu0 0.0
    %546 = vmatpush1.msra.mxu0 0.0
    %547 = vmatprep.subr.mxu0 0.0
    %548 = vmatpush1.msra.mxu0 0.0
    %549 = vmatprep.mubr.f32.mxu0 0.0
    %550 = vmatmul.mubr.f32.gmra.mrb[0].mxu0 %v480
    %v551 = vpop.f32.mrb[0].mxu0
    %v552 = vadd.f32 %v478, %v551
    %v553 = vpop.f32.mrb[0].mxu0
    %554 = vdwg.mxu0
    %v555 = vmax.f32 %v552, 0.0
    %v556 = vld [vmem:[#allocation4 + $0xc8] sm:$0xff]
    %v557 = vld [vmem:[#allocation4 + $0xd0] sm:$0xff]
    %v558 = vld [vmem:[#allocation4 + $0xd8] sm:$0x3f]
    %v560 = vsel %vm349, %v555, 0
    %v563 = vsel %vm235, %v558, 0
    %565 = vmatprep.subr.mxu0 0.0
    %566 = vmatpush1.msra.mxu0 %v556
    %567 = vmatprep.subr.mxu0 0.0
    %568 = vmatpush1.msra.mxu0 %v557
    %569 = vmatprep.subr.mxu0 0.0
    %570 = vmatpush1.msra.mxu0 %v563
    %571 = vmatprep.subr.mxu0 0.0
    %572 = vmatpush1.msra.mxu0 0.0
    %573 = vmatprep.subr.mxu0 0.0
    %574 = vmatpush1.msra.mxu0 0.0
    %575 = vmatprep.subr.mxu0 0.0
    %576 = vmatpush1.msra.mxu0 0.0
    %577 = vmatprep.subr.mxu0 0.0
    %578 = vmatpush1.msra.mxu0 0.0
    %579 = vmatprep.subr.mxu0 0.0
    %580 = vmatpush1.msra.mxu0 0.0
    %581 = vmatprep.subr.mxu0 0.0
    %582 = vmatpush1.msra.mxu0 0.0
    %583 = vmatprep.subr.mxu0 0.0
    %584 = vmatpush1.msra.mxu0 0.0
    %585 = vmatprep.subr.mxu0 0.0
    %586 = vmatpush1.msra.mxu0 0.0
    %587 = vmatprep.subr.mxu0 0.0
    %588 = vmatpush1.msra.mxu0 0.0
    %589 = vmatprep.subr.mxu0 0.0
    %590 = vmatpush1.msra.mxu0 0.0
    %591 = vmatprep.subr.mxu0 0.0
    %592 = vmatpush1.msra.mxu0 0.0
    %593 = vmatprep.subr.mxu0 0.0
    %594 = vmatpush1.msra.mxu0 0.0
    %595 = vmatprep.subr.mxu0 0.0
    %596 = vmatpush1.msra.mxu0 0.0
    %597 = vmatprep.subr.mxu0 0.0
    %598 = vmatpush1.msra.mxu0 0.0
    %599 = vmatprep.subr.mxu0 0.0
    %600 = vmatpush1.msra.mxu0 0.0
    %601 = vmatprep.subr.mxu0 0.0
    %602 = vmatpush1.msra.mxu0 0.0
    %603 = vmatprep.subr.mxu0 0.0
    %604 = vmatpush1.msra.mxu0 0.0
    %605 = vmatprep.subr.mxu0 0.0
    %606 = vmatpush1.msra.mxu0 0.0
    %607 = vmatprep.subr.mxu0 0.0
    %608 = vmatpush1.msra.mxu0 0.0
    %609 = vmatprep.subr.mxu0 0.0
    %610 = vmatpush1.msra.mxu0 0.0
    %611 = vmatprep.subr.mxu0 0.0
    %612 = vmatpush1.msra.mxu0 0.0
    %613 = vmatprep.subr.mxu0 0.0
    %614 = vmatpush1.msra.mxu0 0.0
    %615 = vmatprep.subr.mxu0 0.0
    %616 = vmatpush1.msra.mxu0 0.0
    %617 = vmatprep.subr.mxu0 0.0
    %618 = vmatpush1.msra.mxu0 0.0
    %619 = vmatprep.subr.mxu0 0.0
    %620 = vmatpush1.msra.mxu0 0.0
    %621 = vmatprep.subr.mxu0 0.0
    %622 = vmatpush1.msra.mxu0 0.0
    %623 = vmatprep.subr.mxu0 0.0
    %624 = vmatpush1.msra.mxu0 0.0
    %625 = vmatprep.subr.mxu0 0.0
    %626 = vmatpush1.msra.mxu0 0.0
    %627 = vmatprep.subr.mxu0 0.0
    %628 = vmatpush1.msra.mxu0 0.0
    %629 = vmatprep.mubr.f32.mxu0 0.0
    %630 = vmatmul.mubr.f32.gmra.mrb[0].mxu0 %v560
    %v631 = vpop.f32.mrb[0].mxu0
    %v632 = vadd.f32 0.0, %v631
    %v633 = vpop.f32.mrb[0].mxu0
    %634 = vdwg.mxu0
    %v636 = vrot.slane %v632, 2
    %637 = vrot.lane.b32.xlu0 %v636, 116
    %v638 = vpop.permute.xlu0 %637
    %v640 = vrot.slane %v632, 4
    %641 = vrot.lane.b32.xlu0 %v640, 104
    %v642 = vpop.permute.xlu0 %641
    %v644 = vsel %vm235, %v632, %v638
    %v645 = vsel %vm223, %v638, %v642
    %v646 = vld [vmem:[#allocation4 + $0xe0] sm:$0xff]
    %v647 = vld [vmem:[#allocation4 + $0xe8] sm:$0xff]
    %v648 = vld [vmem:[#allocation4 + $0xf0] sm:$0x3]
    %v649 = vld [vmem:[#allocation6 + $0x4] sm:$0x1]
    %v650 = vlaneseq
    %v651 = vshrl.u32 %v650, 7
    %v652 = vsub.s32 0, %v651
    %v653 = vrot.slane %v649, %v652
    %vm654 = vcmask 146432
    %v656 = vsel %vm654, %v646, 0
    %v659 = vsel %vm654, %v647, 0
    %v662 = vsel %vm654, %v648, 0
    %v664 = vsel %vm221, %v642, 0
    %666 = vmatprep.subr.mxu0 0.0
    %667 = vmatpush1.msra.mxu0 %v644
    %668 = vmatprep.subr.mxu0 0.0
    %669 = vmatpush1.msra.mxu0 %v645
    %670 = vmatprep.subr.mxu0 0.0
    %671 = vmatpush1.msra.mxu0 %v664
    %672 = vmatprep.subr.mxu0 0.0
    %673 = vmatpush1.msra.mxu0 0.0
    %674 = vmatprep.subr.mxu0 0.0
    %675 = vmatpush1.msra.mxu0 0.0
    %676 = vmatprep.subr.mxu0 0.0
    %677 = vmatpush1.msra.mxu0 0.0
    %678 = vmatprep.subr.mxu0 0.0
    %679 = vmatpush1.msra.mxu0 0.0
    %680 = vmatprep.subr.mxu0 0.0
    %681 = vmatpush1.msra.mxu0 0.0
    %682 = vmatprep.subr.mxu0 0.0
    %683 = vmatpush1.msra.mxu0 0.0
    %684 = vmatprep.subr.mxu0 0.0
    %685 = vmatpush1.msra.mxu0 0.0
    %686 = vmatprep.subr.mxu0 0.0
    %687 = vmatpush1.msra.mxu0 0.0
    %688 = vmatprep.subr.mxu0 0.0
    %689 = vmatpush1.msra.mxu0 0.0
    %690 = vmatprep.subr.mxu0 0.0
    %691 = vmatpush1.msra.mxu0 0.0
    %692 = vmatprep.subr.mxu0 0.0
    %693 = vmatpush1.msra.mxu0 0.0
    %694 = vmatprep.subr.mxu0 0.0
    %695 = vmatpush1.msra.mxu0 0.0
    %696 = vmatprep.subr.mxu0 0.0
    %697 = vmatpush1.msra.mxu0 0.0
    %698 = vmatprep.subr.mxu0 0.0
    %699 = vmatpush1.msra.mxu0 0.0
    %700 = vmatprep.subr.mxu0 0.0
    %701 = vmatpush1.msra.mxu0 0.0
    %702 = vmatprep.subr.mxu0 0.0
    %703 = vmatpush1.msra.mxu0 0.0
    %704 = vmatprep.subr.mxu0 0.0
    %705 = vmatpush1.msra.mxu0 0.0
    %706 = vmatprep.subr.mxu0 0.0
    %707 = vmatpush1.msra.mxu0 0.0
    %708 = vmatprep.subr.mxu0 0.0
    %709 = vmatpush1.msra.mxu0 0.0
    %710 = vmatprep.subr.mxu0 0.0
    %711 = vmatpush1.msra.mxu0 0.0
    %712 = vmatprep.subr.mxu0 0.0
    %713 = vmatpush1.msra.mxu0 0.0
    %714 = vmatprep.subr.mxu0 0.0
    %715 = vmatpush1.msra.mxu0 0.0
    %716 = vmatprep.subr.mxu0 0.0
    %717 = vmatpush1.msra.mxu0 0.0
    %718 = vmatprep.subr.mxu0 0.0
    %719 = vmatpush1.msra.mxu0 0.0
    %720 = vmatprep.subr.mxu0 0.0
    %721 = vmatpush1.msra.mxu0 0.0
    %722 = vmatprep.subr.mxu0 0.0
    %723 = vmatpush1.msra.mxu0 0.0
    %724 = vmatprep.subr.mxu0 0.0
    %725 = vmatpush1.msra.mxu0 0.0
    %726 = vmatprep.subr.mxu0 0.0
    %727 = vmatpush1.msra.mxu0 0.0
    %728 = vmatprep.subr.mxu0 0.0
    %729 = vmatpush1.msra.mxu0 0.0
    %730 = vmatprep.mubr.f32.mxu0 0.0
    %731 = vmatmul.mubr.f32.gmra.mrb[0].mxu0 %v656
    %v732 = vpop.f32.mrb[0].mxu0
    %v733 = vadd.f32 %v653, %v732
    %v734 = vpop.f32.mrb[0].mxu0
    %735 = vmatprep.mubr.f32.mxu0 0.0
    %736 = vmatmul.mubr.f32.gmra.mrb[0].mxu0 %v659
    %v737 = vpop.f32.mrb[0].mxu0
    %v738 = vadd.f32 %v653, %v737
    %v739 = vpop.f32.mrb[0].mxu0
    %740 = vmatprep.mubr.f32.mxu0 0.0
    %741 = vmatmul.mubr.f32.gmra.mrb[0].mxu0 %v662
    %v742 = vpop.f32.mrb[0].mxu0
    %v743 = vadd.f32 %v653, %v742
    %v744 = vpop.f32.mrb[0].mxu0
    %745 = vdwg.mxu0
    %v746 = vadd.s32 %v310, 8
    %v747 = vadd.s32 %v310, 16
    %vm748 = vcmp.lt.s32.totalorder %v310, 0
    %v749 = vsub.s32 0, %v310
    %v750 = vsel %vm748, %v749, %v310
    %v751 = vmul.u32.u64.compose %v750, 3817748708
    %v752 = vextract.low.u32 %v751
    %v753 = vextract.high.u32 %v751
    %v754 = vshrl.u32 %v753, 3
    %v755 = vmul.u32 %v754, 9
    %v756 = vsub.s32 %v750, %v755
    %v757 = vsub.s32 0, %v756
    %v758 = vsel %vm748, %v757, %v756
    %vm759 = vcmp.lt.s32.totalorder %v746, 0
    %v760 = vsub.s32 0, %v746
    %v761 = vsel %vm759, %v760, %v746
    %v762 = vmul.u32.u64.compose %v761, 3817748708
    %v763 = vextract.low.u32 %v762
    %v764 = vextract.high.u32 %v762
    %v765 = vshrl.u32 %v764, 3
    %v766 = vmul.u32 %v765, 9
    %v767 = vsub.s32 %v761, %v766
    %v768 = vsub.s32 0, %v767
    %v769 = vsel %vm759, %v768, %v767
    %vm770 = vcmp.lt.s32.totalorder %v747, 0
    %v771 = vsub.s32 0, %v747
    %v772 = vsel %vm770, %v771, %v747
    %v773 = vmul.u32.u64.compose %v772, 3817748708
    %v774 = vextract.low.u32 %v773
    %v775 = vextract.high.u32 %v773
    %v776 = vshrl.u32 %v775, 3
    %v777 = vmul.u32 %v776, 9
    %v778 = vsub.s32 %v772, %v777
    %v779 = vsub.s32 0, %v778
    %v780 = vsel %vm770, %v779, %v778
    %vm781 = vcmp.ne.s32.totalorder %v758, 0
    %vm782 = vcmp.ne.s32.totalorder %v769, 0
    %vm783 = vcmp.ne.s32.totalorder %v780, 0
    %vm784 = vcmp.lt.s32.totalorder %v758, 0
    %vm785 = vcmp.lt.s32.totalorder %v769, 0
    %vm786 = vcmp.lt.s32.totalorder %v780, 0
    %vm787 = vmand %vm784, %vm781
    %vm788 = vmand %vm785, %vm782
    %vm789 = vmand %vm786, %vm783
    %v790 = vadd.s32 %v758, 9
    %v791 = vadd.s32 %v769, 9
    %v792 = vadd.s32 %v780, 9
    %v793 = vsel %vm787, %v790, %v758
    %v794 = vsel %vm788, %v791, %v769
    %v795 = vsel %vm789, %v792, %v780
    %v799 = vrot.slane %v733, 7
    %v800 = vrot.slane %v738, 7
    %v801 = vsel %vm330, %v799, %v800
    %v802 = vrot.slane %v743, 7
    %v803 = vsel %vm330, %v800, %v802
    %v807 = vsel %vm330, 0.0, %v799
    %vm808 = vcmask 1042432
    %v809 = vsel %vm808, %v803, 0.0
    %vm810 = vcmp.lt.s32.totalorder %v793, 1
    %vm811 = vcmp.lt.s32.totalorder %v794, 1
    %vm812 = vcmp.lt.s32.totalorder %v795, 1
    %v813 = vsel %vm810, 0.0, %v807
    %v814 = vsel %vm811, 0.0, %v801
    %v815 = vsel %vm812, 0.0, %v809
    %vm816 = vcmp.ge.s32.totalorder %v793, 8
    %vm817 = vcmp.ge.s32.totalorder %v794, 8
    %vm818 = vcmp.ge.s32.totalorder %v795, 8
    %v821 = vrot.slane %v807, 2
    %v822 = vrot.slane %v801, 2
    %v823 = vsel %vm235, %v821, %v822
    %v824 = vrot.slane %v809, 2
    %v825 = vsel %vm235, %v822, %v824
    %v829 = vsel %vm816, 0.0, %v823
    %v830 = vsel %vm817, 0.0, %v825
    %v831 = vsel %vm818, 0.0, %v824
    %v832 = vrot.slane %v807, 1
    %v833 = vrot.slane %v801, 1
    %v834 = vsel %vm332, %v832, %v833
    %v835 = vrot.slane %v809, 1
    %v836 = vsel %vm332, %v833, %v835
    %837 = vrot.lane.b32.xlu0 %v834, 12
    %v838 = vpop.permute.xlu0 %837
    %839 = vrot.lane.b32.xlu0 %v836, 12
    %v840 = vpop.permute.xlu0 %839
    %841 = vrot.lane.b32.xlu0 %v835, 12
    %v842 = vpop.permute.xlu0 %841
    %849 = vrot.lane.b32.xlu0 %v829, 24
    %v850 = vpop.permute.xlu0 %849
    %851 = vrot.lane.b32.xlu0 %v830, 24
    %v852 = vpop.permute.xlu0 %851
    %853 = vrot.lane.b32.xlu0 %v831, 24
    %v854 = vpop.permute.xlu0 %853
    %vm858 = vcmask 97280
    %v859 = vsel %vm858, %v813, %v838
    %v860 = vsel %vm858, %v814, %v840
    %v861 = vsel %vm858, %v815, %v842
    %vm862 = vcmask 195584
    %v863 = vsel %vm862, %v859, %v850
    %v864 = vsel %vm862, %v860, %v852
    %v865 = vsel %vm862, %v861, %v854
    %v866 = vld [vmem:[#allocation4 + $0xf8] sm:$0xff]
    %v867 = vld [vmem:[#allocation4 + $0x100] sm:$0xff]
    %v868 = vld [vmem:[#allocation4 + $0x108] sm:$0xff]
    %v869 = vld [vmem:[#allocation4 + $0x110] sm:$0xff]
    %v870 = vld [vmem:[#allocation4 + $0x118] sm:$0xf]
    %v871 = vld [vmem:[#allocation6 + $0x5] sm:$0x1]
    %v872 = vlaneseq
    %v873 = vshrl.u32 %v872, 7
    %v874 = vsub.s32 0, %v873
    %v875 = vrot.slane %v871, %v874
    %vm876 = vcmask 293888
    %v878 = vsel %vm876, %v863, 0
    %v881 = vsel %vm876, %v864, 0
    %v884 = vsel %vm876, %v865, 0
    %v887 = vsel %vm223, %v870, 0
    %889 = vmatprep.subr.mxu0 0.0
    %890 = vmatpush1.msra.mxu0 %v866
    %891 = vmatprep.subr.mxu0 0.0
    %892 = vmatpush1.msra.mxu0 %v867
    %893 = vmatprep.subr.mxu0 0.0
    %894 = vmatpush1.msra.mxu0 %v868
    %895 = vmatprep.subr.mxu0 0.0
    %896 = vmatpush1.msra.mxu0 %v869
    %897 = vmatprep.subr.mxu0 0.0
    %898 = vmatpush1.msra.mxu0 %v887
    %899 = vmatprep.subr.mxu0 0.0
    %900 = vmatpush1.msra.mxu0 0.0
    %901 = vmatprep.subr.mxu0 0.0
    %902 = vmatpush1.msra.mxu0 0.0
    %903 = vmatprep.subr.mxu0 0.0
    %904 = vmatpush1.msra.mxu0 0.0
    %905 = vmatprep.subr.mxu0 0.0
    %906 = vmatpush1.msra.mxu0 0.0
    %907 = vmatprep.subr.mxu0 0.0
    %908 = vmatpush1.msra.mxu0 0.0
    %909 = vmatprep.subr.mxu0 0.0
    %910 = vmatpush1.msra.mxu0 0.0
    %911 = vmatprep.subr.mxu0 0.0
    %912 = vmatpush1.msra.mxu0 0.0
    %913 = vmatprep.subr.mxu0 0.0
    %914 = vmatpush1.msra.mxu0 0.0
    %915 = vmatprep.subr.mxu0 0.0
    %916 = vmatpush1.msra.mxu0 0.0
    %917 = vmatprep.subr.mxu0 0.0
    %918 = vmatpush1.msra.mxu0 0.0
    %919 = vmatprep.subr.mxu0 0.0
    %920 = vmatpush1.msra.mxu0 0.0
    %921 = vmatprep.subr.mxu0 0.0
    %922 = vmatpush1.msra.mxu0 0.0
    %923 = vmatprep.subr.mxu0 0.0
    %924 = vmatpush1.msra.mxu0 0.0
    %925 = vmatprep.subr.mxu0 0.0
    %926 = vmatpush1.msra.mxu0 0.0
    %927 = vmatprep.subr.mxu0 0.0
    %928 = vmatpush1.msra.mxu0 0.0
    %929 = vmatprep.subr.mxu0 0.0
    %930 = vmatpush1.msra.mxu0 0.0
    %931 = vmatprep.subr.mxu0 0.0
    %932 = vmatpush1.msra.mxu0 0.0
    %933 = vmatprep.subr.mxu0 0.0
    %934 = vmatpush1.msra.mxu0 0.0
    %935 = vmatprep.subr.mxu0 0.0
    %936 = vmatpush1.msra.mxu0 0.0
    %937 = vmatprep.subr.mxu0 0.0
    %938 = vmatpush1.msra.mxu0 0.0
    %939 = vmatprep.subr.mxu0 0.0
    %940 = vmatpush1.msra.mxu0 0.0
    %941 = vmatprep.subr.mxu0 0.0
    %942 = vmatpush1.msra.mxu0 0.0
    %943 = vmatprep.subr.mxu0 0.0
    %944 = vmatpush1.msra.mxu0 0.0
    %945 = vmatprep.subr.mxu0 0.0
    %946 = vmatpush1.msra.mxu0 0.0
    %947 = vmatprep.subr.mxu0 0.0
    %948 = vmatpush1.msra.mxu0 0.0
    %949 = vmatprep.subr.mxu0 0.0
    %950 = vmatpush1.msra.mxu0 0.0
    %951 = vmatprep.subr.mxu0 0.0
    %952 = vmatpush1.msra.mxu0 0.0
    %953 = vmatprep.mubr.f32.mxu0 0.0
    %954 = vmatmul.mubr.f32.gmra.mrb[0].mxu0 %v878
    %v955 = vpop.f32.mrb[0].mxu0
    %v956 = vadd.f32 %v875, %v955
    %v957 = vpop.f32.mrb[0].mxu0
    %958 = vmatprep.mubr.f32.mxu0 0.0
    %959 = vmatmul.mubr.f32.gmra.mrb[0].mxu0 %v881
    %v960 = vpop.f32.mrb[0].mxu0
    %v961 = vadd.f32 %v875, %v960
    %v962 = vpop.f32.mrb[0].mxu0
    %963 = vmatprep.mubr.f32.mxu0 0.0
    %964 = vmatmul.mubr.f32.gmra.mrb[0].mxu0 %v884
    %v965 = vpop.f32.mrb[0].mxu0
    %v966 = vadd.f32 %v875, %v965
    %v967 = vpop.f32.mrb[0].mxu0
    %968 = vdwg.mxu0
    %v969 = vmax.f32 %v956, 0.0
    %v970 = vmax.f32 %v961, 0.0
    %v971 = vmax.f32 %v966, 0.0
    %v975 = vrot.slane %v969, 7
    %v976 = vrot.slane %v970, 7
    %v977 = vsel %vm330, %v975, %v976
    %v978 = vrot.slane %v971, 7
    %v979 = vsel %vm330, %v976, %v978
    %v983 = vsel %vm330, 0.0, %v975
    %v984 = vsel %vm808, %v979, 0.0
    %v985 = vsel %vm810, 0.0, %v983
    %v986 = vsel %vm811, 0.0, %v977
    %v987 = vsel %vm812, 0.0, %v984
    %v990 = vrot.slane %v983, 2
    %v991 = vrot.slane %v977, 2
    %v992 = vsel %vm235, %v990, %v991
    %v993 = vrot.slane %v984, 2
    %v994 = vsel %vm235, %v991, %v993
    %v998 = vsel %vm816, 0.0, %v992
    %v999 = vsel %vm817, 0.0, %v994
    %v1000 = vsel %vm818, 0.0, %v993
    %v1001 = vrot.slane %v983, 1
    %v1002 = vrot.slane %v977, 1
    %v1003 = vsel %vm332, %v1001, %v1002
    %v1004 = vrot.slane %v984, 1
    %v1005 = vsel %vm332, %v1002, %v1004
    %1006 = vrot.lane.b32.xlu0 %v1003, 12
    %v1007 = vpop.permute.xlu0 %1006
    %1008 = vrot.lane.b32.xlu0 %v1005, 12
    %v1009 = vpop.permute.xlu0 %1008
    %1010 = vrot.lane.b32.xlu0 %v1004, 12
    %v1011 = vpop.permute.xlu0 %1010
    %1018 = vrot.lane.b32.xlu0 %v998, 24
    %v1019 = vpop.permute.xlu0 %1018
    %1020 = vrot.lane.b32.xlu0 %v999, 24
    %v1021 = vpop.permute.xlu0 %1020
    %1022 = vrot.lane.b32.xlu0 %v1000, 24
    %v1023 = vpop.permute.xlu0 %1022
    %v1027 = vsel %vm858, %v985, %v1007
    %v1028 = vsel %vm858, %v986, %v1009
    %v1029 = vsel %vm858, %v987, %v1011
    %v1030 = vsel %vm862, %v1027, %v1019
    %v1031 = vsel %vm862, %v1028, %v1021
    %v1032 = vsel %vm862, %v1029, %v1023
    %v1033 = vld [vmem:[#allocation4 + $0x120] sm:$0xff]
    %v1034 = vld [vmem:[#allocation4 + $0x128] sm:$0xff]
    %v1035 = vld [vmem:[#allocation4 + $0x130] sm:$0xff]
    %v1036 = vld [vmem:[#allocation4 + $0x138] sm:$0xff]
    %v1037 = vld [vmem:[#allocation4 + $0x140] sm:$0xf]
    %v1038 = vld [vmem:[#allocation6 + $0x6] sm:$0x1]
    %v1039 = vlaneseq
    %v1040 = vshrl.u32 %v1039, 7
    %v1041 = vsub.s32 0, %v1040
    %v1042 = vrot.slane %v1038, %v1041
    %v1044 = vsel %vm876, %v1030, 0
    %v1047 = vsel %vm876, %v1031, 0
    %v1050 = vsel %vm876, %v1032, 0
    %v1053 = vsel %vm223, %v1037, 0
    %1055 = vmatprep.subr.mxu0 0.0
    %1056 = vmatpush1.msra.mxu0 %v1033
    %1057 = vmatprep.subr.mxu0 0.0
    %1058 = vmatpush1.msra.mxu0 %v1034
    %1059 = vmatprep.subr.mxu0 0.0
    %1060 = vmatpush1.msra.mxu0 %v1035
    %1061 = vmatprep.subr.mxu0 0.0
    %1062 = vmatpush1.msra.mxu0 %v1036
    %1063 = vmatprep.subr.mxu0 0.0
    %1064 = vmatpush1.msra.mxu0 %v1053
    %1065 = vmatprep.subr.mxu0 0.0
    %1066 = vmatpush1.msra.mxu0 0.0
    %1067 = vmatprep.subr.mxu0 0.0
    %1068 = vmatpush1.msra.mxu0 0.0
    %1069 = vmatprep.subr.mxu0 0.0
    %1070 = vmatpush1.msra.mxu0 0.0
    %1071 = vmatprep.subr.mxu0 0.0
    %1072 = vmatpush1.msra.mxu0 0.0
    %1073 = vmatprep.subr.mxu0 0.0
    %1074 = vmatpush1.msra.mxu0 0.0
    %1075 = vmatprep.subr.mxu0 0.0
    %1076 = vmatpush1.msra.mxu0 0.0
    %1077 = vmatprep.subr.mxu0 0.0
    %1078 = vmatpush1.msra.mxu0 0.0
    %1079 = vmatprep.subr.mxu0 0.0
    %1080 = vmatpush1.msra.mxu0 0.0
    %1081 = vmatprep.subr.mxu0 0.0
    %1082 = vmatpush1.msra.mxu0 0.0
    %1083 = vmatprep.subr.mxu0 0.0
    %1084 = vmatpush1.msra.mxu0 0.0
    %1085 = vmatprep.subr.mxu0 0.0
    %1086 = vmatpush1.msra.mxu0 0.0
    %1087 = vmatprep.subr.mxu0 0.0
    %1088 = vmatpush1.msra.mxu0 0.0
    %1089 = vmatprep.subr.mxu0 0.0
    %1090 = vmatpush1.msra.mxu0 0.0
    %1091 = vmatprep.subr.mxu0 0.0
    %1092 = vmatpush1.msra.mxu0 0.0
    %1093 = vmatprep.subr.mxu0 0.0
    %1094 = vmatpush1.msra.mxu0 0.0
    %1095 = vmatprep.subr.mxu0 0.0
    %1096 = vmatpush1.msra.mxu0 0.0
    %1097 = vmatprep.subr.mxu0 0.0
    %1098 = vmatpush1.msra.mxu0 0.0
    %1099 = vmatprep.subr.mxu0 0.0
    %1100 = vmatpush1.msra.mxu0 0.0
    %1101 = vmatprep.subr.mxu0 0.0
    %1102 = vmatpush1.msra.mxu0 0.0
    %1103 = vmatprep.subr.mxu0 0.0
    %1104 = vmatpush1.msra.mxu0 0.0
    %1105 = vmatprep.subr.mxu0 0.0
    %1106 = vmatpush1.msra.mxu0 0.0
    %1107 = vmatprep.subr.mxu0 0.0
    %1108 = vmatpush1.msra.mxu0 0.0
    %1109 = vmatprep.subr.mxu0 0.0
    %1110 = vmatpush1.msra.mxu0 0.0
    %1111 = vmatprep.subr.mxu0 0.0
    %1112 = vmatpush1.msra.mxu0 0.0
    %1113 = vmatprep.subr.mxu0 0.0
    %1114 = vmatpush1.msra.mxu0 0.0
    %1115 = vmatprep.subr.mxu0 0.0
    %1116 = vmatpush1.msra.mxu0 0.0
    %1117 = vmatprep.subr.mxu0 0.0
    %1118 = vmatpush1.msra.mxu0 0.0
    %1119 = vmatprep.mubr.f32.mxu0 0.0
    %1120 = vmatmul.mubr.f32.gmra.mrb[0].mxu0 %v1044
    %v1121 = vpop.f32.mrb[0].mxu0
    %v1122 = vadd.f32 %v1042, %v1121
    %v1123 = vpop.f32.mrb[0].mxu0
    %1124 = vmatprep.mubr.f32.mxu0 0.0
    %1125 = vmatmul.mubr.f32.gmra.mrb[0].mxu0 %v1047
    %v1126 = vpop.f32.mrb[0].mxu0
    %v1127 = vadd.f32 %v1042, %v1126
    %v1128 = vpop.f32.mrb[0].mxu0
    %1129 = vmatprep.mubr.f32.mxu0 0.0
    %1130 = vmatmul.mubr.f32.gmra.mrb[0].mxu0 %v1050
    %v1131 = vpop.f32.mrb[0].mxu0
    %v1132 = vadd.f32 %v1042, %v1131
    %v1133 = vpop.f32.mrb[0].mxu0
    %1134 = vdwg.mxu0
    %v1135 = vmax.f32 %v1122, 0.0
    %v1136 = vmax.f32 %v1127, 0.0
    %v1137 = vmax.f32 %v1132, 0.0
    %v1141 = vrot.slane %v1135, 7
    %v1142 = vrot.slane %v1136, 7
    %v1143 = vsel %vm330, %v1141, %v1142
    %v1144 = vrot.slane %v1137, 7
    %v1145 = vsel %vm330, %v1142, %v1144
    %v1149 = vsel %vm330, 0.0, %v1141
    %v1150 = vsel %vm808, %v1145, 0.0
    %v1151 = vsel %vm810, 0.0, %v1149
    %v1152 = vsel %vm811, 0.0, %v1143
    %v1153 = vsel %vm812, 0.0, %v1150
    %v1156 = vrot.slane %v1149, 2
    %v1157 = vrot.slane %v1143, 2
    %v1158 = vsel %vm235, %v1156, %v1157
    %v1159 = vrot.slane %v1150, 2
    %v1160 = vsel %vm235, %v1157, %v1159
    %v1164 = vsel %vm816, 0.0, %v1158
    %v1165 = vsel %vm817, 0.0, %v1160
    %v1166 = vsel %vm818, 0.0, %v1159
    %v1167 = vrot.slane %v1149, 1
    %v1168 = vrot.slane %v1143, 1
    %v1169 = vsel %vm332, %v1167, %v1168
    %v1170 = vrot.slane %v1150, 1
    %v1171 = vsel %vm332, %v1168, %v1170
    %1172 = vrot.lane.b32.xlu0 %v1169, 12
    %v1173 = vpop.permute.xlu0 %1172
    %1174 = vrot.lane.b32.xlu0 %v1171, 12
    %v1175 = vpop.permute.xlu0 %1174
    %1176 = vrot.lane.b32.xlu0 %v1170, 12
    %v1177 = vpop.permute.xlu0 %1176
    %1184 = vrot.lane.b32.xlu0 %v1164, 24
    %v1185 = vpop.permute.xlu0 %1184
    %1186 = vrot.lane.b32.xlu0 %v1165, 24
    %v1187 = vpop.permute.xlu0 %1186
    %1188 = vrot.lane.b32.xlu0 %v1166, 24
    %v1189 = vpop.permute.xlu0 %1188
    %v1193 = vsel %vm858, %v1151, %v1173
    %v1194 = vsel %vm858, %v1152, %v1175
    %v1195 = vsel %vm858, %v1153, %v1177
    %v1196 = vsel %vm862, %v1193, %v1185
    %v1197 = vsel %vm862, %v1194, %v1187
    %v1198 = vsel %vm862, %v1195, %v1189
    %v1199 = vld [vmem:[#allocation4 + $0x148] sm:$0xff]
    %v1200 = vld [vmem:[#allocation4 + $0x150] sm:$0xff]
    %v1201 = vld [vmem:[#allocation4 + $0x158] sm:$0xff]
    %v1202 = vld [vmem:[#allocation4 + $0x160] sm:$0xff]
    %v1203 = vld [vmem:[#allocation4 + $0x168] sm:$0xf]
    %v1204 = vld [vmem:[#allocation6 + $0x7] sm:$0x1]
    %v1205 = vlaneseq
    %v1206 = vshrl.u32 %v1205, 7
    %v1207 = vsub.s32 0, %v1206
    %v1208 = vrot.slane %v1204, %v1207
    %v1210 = vsel %vm876, %v1196, 0
    %v1213 = vsel %vm876, %v1197, 0
    %v1216 = vsel %vm876, %v1198, 0
    %v1219 = vsel %vm223, %v1203, 0
    %1221 = vmatprep.subr.mxu0 0.0
    %1222 = vmatpush1.msra.mxu0 %v1199
    %1223 = vmatprep.subr.mxu0 0.0
    %1224 = vmatpush1.msra.mxu0 %v1200
    %1225 = vmatprep.subr.mxu0 0.0
    %1226 = vmatpush1.msra.mxu0 %v1201
    %1227 = vmatprep.subr.mxu0 0.0
    %1228 = vmatpush1.msra.mxu0 %v1202
    %1229 = vmatprep.subr.mxu0 0.0
    %1230 = vmatpush1.msra.mxu0 %v1219
    %1231 = vmatprep.subr.mxu0 0.0
    %1232 = vmatpush1.msra.mxu0 0.0
    %1233 = vmatprep.subr.mxu0 0.0
    %1234 = vmatpush1.msra.mxu0 0.0
    %1235 = vmatprep.subr.mxu0 0.0
    %1236 = vmatpush1.msra.mxu0 0.0
    %1237 = vmatprep.subr.mxu0 0.0
    %1238 = vmatpush1.msra.mxu0 0.0
    %1239 = vmatprep.subr.mxu0 0.0
    %1240 = vmatpush1.msra.mxu0 0.0
    %1241 = vmatprep.subr.mxu0 0.0
    %1242 = vmatpush1.msra.mxu0 0.0
    %1243 = vmatprep.subr.mxu0 0.0
    %1244 = vmatpush1.msra.mxu0 0.0
    %1245 = vmatprep.subr.mxu0 0.0
    %1246 = vmatpush1.msra.mxu0 0.0
    %1247 = vmatprep.subr.mxu0 0.0
    %1248 = vmatpush1.msra.mxu0 0.0
    %1249 = vmatprep.subr.mxu0 0.0
    %1250 = vmatpush1.msra.mxu0 0.0
    %1251 = vmatprep.subr.mxu0 0.0
    %1252 = vmatpush1.msra.mxu0 0.0
    %1253 = vmatprep.subr.mxu0 0.0
    %1254 = vmatpush1.msra.mxu0 0.0
    %1255 = vmatprep.subr.mxu0 0.0
    %1256 = vmatpush1.msra.mxu0 0.0
    %1257 = vmatprep.subr.mxu0 0.0
    %1258 = vmatpush1.msra.mxu0 0.0
    %1259 = vmatprep.subr.mxu0 0.0
    %1260 = vmatpush1.msra.mxu0 0.0
    %1261 = vmatprep.subr.mxu0 0.0
    %1262 = vmatpush1.msra.mxu0 0.0
    %1263 = vmatprep.subr.mxu0 0.0
    %1264 = vmatpush1.msra.mxu0 0.0
    %1265 = vmatprep.subr.mxu0 0.0
    %1266 = vmatpush1.msra.mxu0 0.0
    %1267 = vmatprep.subr.mxu0 0.0
    %1268 = vmatpush1.msra.mxu0 0.0
    %1269 = vmatprep.subr.mxu0 0.0
    %1270 = vmatpush1.msra.mxu0 0.0
    %1271 = vmatprep.subr.mxu0 0.0
    %1272 = vmatpush1.msra.mxu0 0.0
    %1273 = vmatprep.subr.mxu0 0.0
    %1274 = vmatpush1.msra.mxu0 0.0
    %1275 = vmatprep.subr.mxu0 0.0
    %1276 = vmatpush1.msra.mxu0 0.0
    %1277 = vmatprep.subr.mxu0 0.0
    %1278 = vmatpush1.msra.mxu0 0.0
    %1279 = vmatprep.subr.mxu0 0.0
    %1280 = vmatpush1.msra.mxu0 0.0
    %1281 = vmatprep.subr.mxu0 0.0
    %1282 = vmatpush1.msra.mxu0 0.0
    %1283 = vmatprep.subr.mxu0 0.0
    %1284 = vmatpush1.msra.mxu0 0.0
    %1285 = vmatprep.mubr.f32.mxu0 0.0
    %1286 = vmatmul.mubr.f32.gmra.mrb[0].mxu0 %v1210
    %v1287 = vpop.f32.mrb[0].mxu0
    %v1288 = vadd.f32 %v1208, %v1287
    %v1289 = vpop.f32.mrb[0].mxu0
    %1290 = vmatprep.mubr.f32.mxu0 0.0
    %1291 = vmatmul.mubr.f32.gmra.mrb[0].mxu0 %v1213
    %v1292 = vpop.f32.mrb[0].mxu0
    %v1293 = vadd.f32 %v1208, %v1292
    %v1294 = vpop.f32.mrb[0].mxu0
    %1295 = vmatprep.mubr.f32.mxu0 0.0
    %1296 = vmatmul.mubr.f32.gmra.mrb[0].mxu0 %v1216
    %v1297 = vpop.f32.mrb[0].mxu0
    %v1298 = vadd.f32 %v1208, %v1297
    %v1299 = vpop.f32.mrb[0].mxu0
    %1300 = vdwg.mxu0
    %vm1301 = vcmask 7168
    %1302 = vst.msk [vmem:[%s3] sm:$0xff] %vm1301, %v1288
    %1303 = vst.msk [vmem:[%s3 + $0x8] sm:$0xff] %vm1301, %v1293
    %vm1304 = vcmask 1024
    %1305 = vst.msk [vmem:[%s3 + $0x10] sm:$0x3] %vm1304, %v1298
    // Predicated region
    $region26: #{tpu_custom_call.1} parent=1 // pred_check
      _
    $region27: #{tpu_custom_call.1} parent=1 // pred_check_branch
      %1307 = sbr.rel (0) target = $region29
    $region28: #{tpu_custom_call.1} parent=1 // pred_region
      _
    $region29: #{tpu_custom_call.1} parent=1 // pred_fallthru
      _
    // Predicated region
    $region30: #{tpu_custom_call.1} parent=1 // pred_check
      _
    $region31: #{tpu_custom_call.1} parent=1 // pred_check_branch
      %1309 = sbr.rel (0) target = $region33
    $region32: #{tpu_custom_call.1} parent=1 // pred_region
      _
    $region33: #{tpu_custom_call.1} parent=1 // pred_fallthru
      _
    %1310 = vsyncpa [#allocation3], 1
    %1311 = vsyncpa [#allocation5], 1

</llo_original>
